<compile_context>
chip_gen: v7x
topology: tpu7x:2x2x1
jax: 0.10.0
libtpu: 0.0.40
codegen_flags: <defaults>
</compile_context>

<pallas_src>
import functools

import jax
import jax.numpy as jnp
from jax.experimental import pallas as pl
from jax.experimental.pallas import tpu as pltpu


def _round_up(x, m):
    return (x + m - 1) // m * m


def _vmem_capacity_bytes():
    try:
        return int(pltpu.get_tpu_info().vmem_capacity_bytes)
    except Exception:
        return 64 * 1024 * 1024  # conservative (v7x physical VMEM)


def _dlgm_kernel(z_ref, eps_ref, w0_ref, w1_ref, w2_ref, wc_ref, b_ref, out_ref, *, hp):
    """One batch tile: two ReLU Linears + (out_module + cov_module) as two dots."""
    cdt = w0_ref.dtype  # MXU compute dtype (bf16 or f32); casts ride in VPU slack

    # hidden_0 + ReLU   (bias add / ReLU in f32; accumulation is f32)
    h = jnp.dot(z_ref[...].astype(cdt), w0_ref[...], preferred_element_type=jnp.float32)
    h = jnp.maximum(h + b_ref[:, :hp], 0.0)

    # hidden_1 + ReLU
    h = jnp.dot(h.astype(cdt), w1_ref[...], preferred_element_type=jnp.float32)
    h = jnp.maximum(h + b_ref[:, hp:2 * hp], 0.0)

    # out_module(h) + cov_module(eps): two accumulating MXU dots (no concat)
    o = jnp.dot(h.astype(cdt), w2_ref[...], preferred_element_type=jnp.float32)
    o = o + jnp.dot(eps_ref[...].astype(cdt), wc_ref[...],
                    preferred_element_type=jnp.float32)
    out_ref[...] = (o + b_ref[:, 2 * hp:]).astype(out_ref.dtype)


def prepare_params(params, compute_dtype=jnp.bfloat16):
    """One-time parameter prep (NOT in the per-call path).

    Transposes PyTorch (out,in) weights to (in,out).  Only the hidden (lane)
    dim is zero-padded to a multiple of 128; contraction dims (in_dim, out_dim
    for eps) and the output lane dim stay at their true sizes.  Biases b0|b1
    and the folded b2+bc are concatenated into one row (single tiny DMA).
    Weights are cast to the MXU compute dtype (bf16 default); biases stay f32.
    """
    hidden, in_dim = params["w0"].shape
    out_dim = params["w2"].shape[0]
    hp = _round_up(hidden, 128)

    w0 = jnp.pad(params["w0"].T, ((0, 0), (0, hp - hidden))).astype(compute_dtype)          # (in_dim, hp)
    w1 = jnp.pad(params["w1"].T, ((0, hp - hidden), (0, hp - hidden))).astype(compute_dtype)  # (hp, hp)
    w2 = jnp.pad(params["w2"].T, ((0, hp - hidden), (0, 0))).astype(compute_dtype)           # (hp, out_dim)
    wc = params["wc"].T.astype(compute_dtype)                                                # (out_dim, out_dim)

    b0 = jnp.pad(params["b0"], (0, hp - hidden))
    b1 = jnp.pad(params["b1"], (0, hp - hidden))
    bout = params["b2"] + params["bc"]
    b_all = jnp.concatenate([b0, b1, bout]).reshape(1, 2 * hp + out_dim).astype(jnp.float32)

    return dict(w0=w0, w1=w1, w2=w2, wc=wc, b=b_all)


@functools.partial(jax.jit, static_argnames=("block_b",))
def dlgm_forward(z, eps, prepped, *, block_b=512):
    """DLGMLayer.forward(z, eps) using a single Pallas kernel."""
    w0, w1, w2, wc, b_all = (prepped["w0"], prepped["w1"], prepped["w2"],
                             prepped["wc"], prepped["b"])
    B, in_dim = z.shape
    hp = w0.shape[1]
    out_dim = w2.shape[1]
    w_itemsize = jnp.dtype(w0.dtype).itemsize

    block_b = min(block_b, _round_up(B, 8))
    grid = (pl.cdiv(B, block_b),)

    # VMEM budget: 2x streamed z/eps/out tiles, 1x single-buffered weights+bias,
    # generation-aware cap (leave headroom for internal scratch).
    tile_bytes = block_b * ((in_dim + out_dim) * z.dtype.itemsize + out_dim * 4)
    weight_bytes = ((in_dim * hp + hp * hp + hp * out_dim + out_dim * out_dim) * w_itemsize
                    + (2 * hp + out_dim) * 4)
    vmem_cap = int(0.75 * _vmem_capacity_bytes())
    vmem_bytes = min(max(2 * tile_bytes + weight_bytes + (8 << 20), 16 << 20), vmem_cap)

    # Constant blocks: single-buffered (no gain from double-buffering a
    # constant index_map; halves weight VMEM residency).
    const = lambda shape: pl.BlockSpec(shape, lambda i: (0, 0),
                                       pipeline_mode=pl.Buffered(1))

    out = pl.pallas_call(
        functools.partial(_dlgm_kernel, hp=hp),
        out_shape=jax.ShapeDtypeStruct((B, out_dim), jnp.float32),
        grid_spec=pl.GridSpec(
            grid=grid,
            in_specs=[
                pl.BlockSpec((block_b, in_dim), lambda i: (i, 0)),    # z tile (unpadded)
                pl.BlockSpec((block_b, out_dim), lambda i: (i, 0)),   # eps tile (unpadded)
                const((in_dim, hp)),                                  # W0^T
                const((hp, hp)),                                      # W1^T
                const((hp, out_dim)),                                 # W2^T
                const((out_dim, out_dim)),                            # Wc^T
                const((1, 2 * hp + out_dim)),                         # [b0 | b1 | b2+bc]
            ],
            out_specs=pl.BlockSpec((block_b, out_dim), lambda i: (i, 0)),
        ),
        compiler_params=pltpu.CompilerParams(
            dimension_semantics=("parallel",),
            vmem_limit_bytes=vmem_bytes,
        ),
    )(z, eps, w0, w1, w2, wc, b_all)

    return out


def _init_linear(key, out_features, in_features, dtype=jnp.float32):
    """PyTorch-style uniform(-1/sqrt(fan_in), 1/sqrt(fan_in)) init."""
    kw, kb = jax.random.split(key)
    bound = 1.0 / jnp.sqrt(jnp.array(in_features, dtype))
    w = jax.random.uniform(kw, (out_features, in_features), dtype, -bound, bound)
    b = jax.random.uniform(kb, (out_features,), dtype, -bound, bound)
    return w, b


def _reference_forward(z, eps, p):
    """Pure-JAX reference matching PyTorch DLGMLayer.forward."""
    h = jnp.maximum(z @ p["w0"].T + p["b0"], 0.0)
    h = jnp.maximum(h @ p["w1"].T + p["b1"], 0.0)
    return (eps @ p["wc"].T + p["bc"]) + (h @ p["w2"].T + p["b2"])


if __name__ == "__main__":
    # DLGMLayer(pins={'dim':16}, pouts={'dim':16},
    #           phidden={'dim':32,'nlayers':2,'batch_norm':False})
    batch, in_dim, hidden, out_dim = 512, 16, 32, 16  # 2 grid steps at block_b=256

    key = jax.random.PRNGKey(0)
    k_z, k_e, k0, k1, k2, kc = jax.random.split(key, 6)

    z = jax.random.normal(k_z, (batch, in_dim), jnp.float32)
    eps = jax.random.normal(k_e, (batch, out_dim), jnp.float32)

    w0, b0 = _init_linear(k0, hidden, in_dim)     # hidden_0: in_dim -> hidden
    w1, b1 = _init_linear(k1, hidden, hidden)     # hidden_1: hidden -> hidden
    w2, b2 = _init_linear(k2, out_dim, hidden)    # out_module: hidden -> out_dim
    wc, bc = _init_linear(kc, out_dim, out_dim)   # cov_module: out_dim -> out_dim
    params = dict(w0=w0, b0=b0, w1=w1, b1=b1, w2=w2, b2=b2, wc=wc, bc=bc)

    y_ref = _reference_forward(z, eps, params)

    # bf16 MXU operands (default; preferred on v5e/v6e/v7x), f32 accumulation.
    prepped_bf16 = prepare_params(params, compute_dtype=jnp.bfloat16)
    y16 = dlgm_forward(z, eps, prepped_bf16, block_b=256)
    y16 = jax.block_until_ready(y16)
    assert y16.shape == (batch, out_dim)
    assert bool(jnp.all(jnp.isfinite(y16)))
    assert jnp.allclose(y16, y_ref, atol=1e-1, rtol=1e-1)

    # f32 MXU operands (highest precision path).
    prepped_f32 = prepare_params(params, compute_dtype=jnp.float32)
    y = dlgm_forward(z, eps, prepped_f32, block_b=256)
    y = jax.block_until_ready(y)
    assert y.shape == (batch, out_dim)
    assert jnp.allclose(y, y_ref, atol=2e-2, rtol=2e-2)

    print("KERNEL_OK")
</pallas_src>

<mosaic_0001>
module attributes {stable_mosaic.version = 11 : i64} {
  func.func @_dlgm_kernel(%arg0: i32, %arg1: memref<256x16xf32, #tpu.memory_space<vmem>>, %arg2: memref<256x16xf32, #tpu.memory_space<vmem>>, %arg3: memref<16x128xbf16, #tpu.memory_space<vmem>>, %arg4: memref<128x128xbf16, #tpu.memory_space<vmem>>, %arg5: memref<128x16xbf16, #tpu.memory_space<vmem>>, %arg6: memref<16x16xbf16, #tpu.memory_space<vmem>>, %arg7: memref<1x272xf32, #tpu.memory_space<vmem>>, %arg8: memref<256x16xf32, #tpu.memory_space<vmem>>) attributes {dimension_semantics = [#tpu.dimension_semantics<parallel>], iteration_bounds = array<i64: 2>, scalar_prefetch = 0 : i64, scratch_operands = 0 : i64, tpu.core_type = #tpu.core_type<tc>, window_params = [{transform_indices = @transform_0, window_bounds = array<i64: 256, 16>}, {transform_indices = @transform_1, window_bounds = array<i64: 256, 16>}, {pipeline_mode = #tpu.pipeline_mode<synchronous>, transform_indices = @transform_2, window_bounds = array<i64: 16, 128>}, {pipeline_mode = #tpu.pipeline_mode<synchronous>, transform_indices = @transform_3, window_bounds = array<i64: 128, 128>}, {pipeline_mode = #tpu.pipeline_mode<synchronous>, transform_indices = @transform_4, window_bounds = array<i64: 128, 16>}, {pipeline_mode = #tpu.pipeline_mode<synchronous>, transform_indices = @transform_5, window_bounds = array<i64: 16, 16>}, {pipeline_mode = #tpu.pipeline_mode<synchronous>, transform_indices = @transform_6, window_bounds = array<i64: 1, 272>}, {transform_indices = @transform_7, window_bounds = array<i64: 256, 16>}]} {
    %c0 = arith.constant 0 : index
    %c0_0 = arith.constant 0 : index
    %0 = vector.load %arg1[%c0, %c0_0] : memref<256x16xf32, #tpu.memory_space<vmem>>, vector<256x16xf32>
    %1 = arith.truncf %0 : vector<256x16xf32> to vector<256x16xbf16>
    %c0_1 = arith.constant 0 : index
    %c0_2 = arith.constant 0 : index
    %2 = vector.load %arg3[%c0_1, %c0_2] : memref<16x128xbf16, #tpu.memory_space<vmem>>, vector<16x128xbf16>
    %cst = arith.constant dense<0.000000e+00> : vector<256x128xf32>
    %3 = tpu.matmul %1, %2, %cst {dimension_numbers = #tpu.dot_dimension_numbers<[1], [0], [0], [1], [0, 0, 1, 1], [], []>} : vector<256x16xbf16>, vector<16x128xbf16>, vector<256x128xf32> -> vector<256x128xf32>
    %c0_3 = arith.constant 0 : index
    %c0_4 = arith.constant 0 : index
    %4 = vector.load %arg7[%c0_3, %c0_4] : memref<1x272xf32, #tpu.memory_space<vmem>>, vector<1x128xf32>
    %5 = vector.broadcast %4 : vector<1x128xf32> to vector<256x128xf32>
    %6 = arith.addf %3, %5 : vector<256x128xf32>
    %cst_5 = arith.constant 0.000000e+00 : f32
    %7 = vector.broadcast %cst_5 : f32 to vector<256x128xf32>
    %8 = arith.maximumf %6, %7 : vector<256x128xf32>
    %9 = arith.truncf %8 : vector<256x128xf32> to vector<256x128xbf16>
    %c0_6 = arith.constant 0 : index
    %c0_7 = arith.constant 0 : index
    %10 = vector.load %arg4[%c0_6, %c0_7] : memref<128x128xbf16, #tpu.memory_space<vmem>>, vector<128x128xbf16>
    %cst_8 = arith.constant dense<0.000000e+00> : vector<256x128xf32>
    %11 = tpu.matmul %9, %10, %cst_8 {dimension_numbers = #tpu.dot_dimension_numbers<[1], [0], [0], [1], [0, 0, 1, 1], [], []>} : vector<256x128xbf16>, vector<128x128xbf16>, vector<256x128xf32> -> vector<256x128xf32>
    %c0_9 = arith.constant 0 : index
    %c128 = arith.constant 128 : index
    %12 = vector.load %arg7[%c0_9, %c128] : memref<1x272xf32, #tpu.memory_space<vmem>>, vector<1x128xf32>
    %13 = vector.broadcast %12 : vector<1x128xf32> to vector<256x128xf32>
    %14 = arith.addf %11, %13 : vector<256x128xf32>
    %cst_10 = arith.constant 0.000000e+00 : f32
    %15 = vector.broadcast %cst_10 : f32 to vector<256x128xf32>
    %16 = arith.maximumf %14, %15 : vector<256x128xf32>
    %17 = arith.truncf %16 : vector<256x128xf32> to vector<256x128xbf16>
    %c0_11 = arith.constant 0 : index
    %c0_12 = arith.constant 0 : index
    %18 = vector.load %arg5[%c0_11, %c0_12] : memref<128x16xbf16, #tpu.memory_space<vmem>>, vector<128x16xbf16>
    %cst_13 = arith.constant dense<0.000000e+00> : vector<256x16xf32>
    %19 = tpu.matmul %17, %18, %cst_13 {dimension_numbers = #tpu.dot_dimension_numbers<[1], [0], [0], [1], [0, 0, 1, 1], [], []>} : vector<256x128xbf16>, vector<128x16xbf16>, vector<256x16xf32> -> vector<256x16xf32>
    %c0_14 = arith.constant 0 : index
    %c0_15 = arith.constant 0 : index
    %20 = vector.load %arg2[%c0_14, %c0_15] : memref<256x16xf32, #tpu.memory_space<vmem>>, vector<256x16xf32>
    %21 = arith.truncf %20 : vector<256x16xf32> to vector<256x16xbf16>
    %c0_16 = arith.constant 0 : index
    %c0_17 = arith.constant 0 : index
    %22 = vector.load %arg6[%c0_16, %c0_17] : memref<16x16xbf16, #tpu.memory_space<vmem>>, vector<16x16xbf16>
    %cst_18 = arith.constant dense<0.000000e+00> : vector<256x16xf32>
    %23 = tpu.matmul %21, %22, %cst_18 {dimension_numbers = #tpu.dot_dimension_numbers<[1], [0], [0], [1], [0, 0, 1, 1], [], []>} : vector<256x16xbf16>, vector<16x16xbf16>, vector<256x16xf32> -> vector<256x16xf32>
    %24 = arith.addf %19, %23 : vector<256x16xf32>
    %c0_19 = arith.constant 0 : index
    %c256 = arith.constant 256 : index
    %25 = vector.load %arg7[%c0_19, %c256] : memref<1x272xf32, #tpu.memory_space<vmem>>, vector<1x16xf32>
    %26 = vector.broadcast %25 : vector<1x16xf32> to vector<256x16xf32>
    %27 = arith.addf %24, %26 : vector<256x16xf32>
    %c0_20 = arith.constant 0 : index
    %c0_21 = arith.constant 0 : index
    %28 = vector.load %arg8[%c0_20, %c0_21] : memref<256x16xf32, #tpu.memory_space<vmem>>, vector<256x16xf32>
    tpu.vector_store %arg8[%c0_20, %c0_21], %27 {strides = array<i32>} : memref<256x16xf32, #tpu.memory_space<vmem>>, vector<256x16xf32>,
    return
  }
  func.func @transform_0(%arg0: i32) -> (i32, i32) {
    %c0_i32 = arith.constant 0 : i32
    %c0_i32_0 = arith.constant 0 : i32
    return %arg0, %c0_i32 : i32, i32
  }
  func.func @transform_1(%arg0: i32) -> (i32, i32) {
    %c0_i32 = arith.constant 0 : i32
    %c0_i32_0 = arith.constant 0 : i32
    return %arg0, %c0_i32 : i32, i32
  }
  func.func @transform_2(%arg0: i32) -> (i32, i32) {
    %c0_i32 = arith.constant 0 : i32
    %c0_i32_0 = arith.constant 0 : i32
    %c0_i32_1 = arith.constant 0 : i32
    return %c0_i32, %c0_i32_0 : i32, i32
  }
  func.func @transform_3(%arg0: i32) -> (i32, i32) {
    %c0_i32 = arith.constant 0 : i32
    %c0_i32_0 = arith.constant 0 : i32
    %c0_i32_1 = arith.constant 0 : i32
    return %c0_i32, %c0_i32_0 : i32, i32
  }
  func.func @transform_4(%arg0: i32) -> (i32, i32) {
    %c0_i32 = arith.constant 0 : i32
    %c0_i32_0 = arith.constant 0 : i32
    %c0_i32_1 = arith.constant 0 : i32
    return %c0_i32, %c0_i32_0 : i32, i32
  }
  func.func @transform_5(%arg0: i32) -> (i32, i32) {
    %c0_i32 = arith.constant 0 : i32
    %c0_i32_0 = arith.constant 0 : i32
    %c0_i32_1 = arith.constant 0 : i32
    return %c0_i32, %c0_i32_0 : i32, i32
  }
  func.func @transform_6(%arg0: i32) -> (i32, i32) {
    %c0_i32 = arith.constant 0 : i32
    %c0_i32_0 = arith.constant 0 : i32
    %c0_i32_1 = arith.constant 0 : i32
    return %c0_i32, %c0_i32_0 : i32, i32
  }
  func.func @transform_7(%arg0: i32) -> (i32, i32) {
    %c0_i32 = arith.constant 0 : i32
    %c0_i32_0 = arith.constant 0 : i32
    return %arg0, %c0_i32 : i32, i32
  }
}

</mosaic_0001>

<llo_original>
// kernel: dlgm_forward.1
$region0: #{dlgm_forward.1}
  #allocation0 [shape = 'u32[]', space=smem, size = 0x4, offset = 0x4, fixed_abs, tag = 'smem constant byte address 0x4 - core index']
  #allocation1 [shape = 'u32[144,128]{1,0:T(1,128)}', space=vmem, size = 0x12000, scoped, tag = 'internal scratch']
  %s0 = inlined_call_operand.vmem [shape: f32[512,16], index: 0, kind: input, shape index: {}]
  %s1 = inlined_call_operand.vmem [shape: f32[512,16], index: 1, kind: input, shape index: {}]
  %s2 = inlined_call_operand.vmem [shape: bf16[16,128], index: 2, kind: input, shape index: {}]
  %s3 = inlined_call_operand.vmem [shape: bf16[128,128], index: 3, kind: input, shape index: {}]
  %s4 = inlined_call_operand.vmem [shape: bf16[128,16], index: 4, kind: input, shape index: {}]
  %s5 = inlined_call_operand.vmem [shape: bf16[16,16], index: 5, kind: input, shape index: {}]
  %s6 = inlined_call_operand.vmem [shape: f32[1,272], index: 6, kind: input, shape index: {}]
  %s7 = inlined_call_operand.vmem [shape: f32[512,16], index: 7, kind: output, shape index: {}]
  %s8 = sld [smem:[#allocation0]]
  $region61: #{dlgm_forward.1} parent=0
    _
  %s10 = ssub.s32 1, %s8
  %s11 = scalar_select 0, %s10, %s8
  loop: start=0, step=1, limit=4
  $region2: #{dlgm_forward.1} parent=0 // loop_pre_header
    _
  $region3: #{dlgm_forward.1} parent=0 // loop_header
    %s13 = sphi 0, %s17
    %p14 = scmp.ge.s32.totalorder %s13, 4
    %s23 = sphi 0, %s25
    %s26 = sphi 0, %s23
    %s27 = sphi 0, %s26
    %s43 = sphi 0, %s27
    %s49 = sphi 0, %s51
    %s52 = sphi 0, %s49
    %s53 = sphi 0, %s52
    %s69 = sphi 0, %s53
    %s73 = sphi 0, %s73
    %s75 = sphi 0, %s73
    %s76 = sphi 0, %s75
    %s90 = sphi 0, %s76
    %s94 = sphi 0, %s94
    %s96 = sphi 0, %s94
    %s97 = sphi 0, %s96
    %s111 = sphi 0, %s97
    %s115 = sphi 0, %s115
    %s117 = sphi 0, %s115
    %s118 = sphi 0, %s117
    %s132 = sphi 0, %s118
    %s136 = sphi 0, %s136
    %s138 = sphi 0, %s136
    %s139 = sphi 0, %s138
    %s153 = sphi 0, %s139
    %s157 = sphi 0, %s157
    %s159 = sphi 0, %s157
    %s160 = sphi 0, %s159
    %s174 = sphi 0, %s160
    %s180 = sphi 0, %s182
    %s183 = sphi 0, %s180
    %s184 = sphi 0, %s183
    %s200 = sphi 0, %s184
  $region4: #{dlgm_forward.1} parent=0 // loop_header_branch
    %16 = sbr.rel (%p14) target = $region8
  $region5: #{dlgm_forward.1} parent=0 // loop_body
    %s18 = ssub.s32 %s13, 1
    %s19 = ssub.s32 %s13, 2
    %s20 = sadd.s32 %s13, 1
    %s21 = ssub.s32 %s13, %s20
    %p22 = scmp.eq.s32.totalorder %s21, 0
    %s24 = sadd.s32 %s23, 1
    %s25 = scalar_select %p22, %s23, %s24
    %p28 = pneg %p22
    %p29 = scmp.eq.s32.totalorder %s13, 1
    %p30 = por %p28, %p29
    %p31 = scmp.ne.s32.totalorder %s23, %s26
    %p32 = scmp.eq.s32.totalorder %s13, 0
    %p33 = por %p31, %p32
    %p34 = scmp.ne.s32.totalorder %s23, %s26
    %p35 = scmp.eq.s32.totalorder %s18, 1
    %p36 = por %p34, %p35
    %p37 = scmp.ne.s32.totalorder %s26, %s27
    %p38 = scmp.eq.s32.totalorder %s18, 0
    %p39 = por %p37, %p38
    %p40 = scmp.ne.s32.totalorder %s26, %s27
    %p41 = scmp.eq.s32.totalorder %s19, 1
    %p42 = por %p40, %p41
    %p44 = scmp.ne.s32.totalorder %s27, %s43
    %p45 = scmp.eq.s32.totalorder %s19, 0
    %p46 = por %p44, %p45
    %s47 = ssub.s32 %s13, %s20
    %p48 = scmp.eq.s32.totalorder %s47, 0
    %s50 = sadd.s32 %s49, 1
    %s51 = scalar_select %p48, %s49, %s50
    %p54 = pneg %p48
    %p55 = scmp.eq.s32.totalorder %s13, 1
    %p56 = por %p54, %p55
    %p57 = scmp.ne.s32.totalorder %s49, %s52
    %p58 = scmp.eq.s32.totalorder %s13, 0
    %p59 = por %p57, %p58
    %p60 = scmp.ne.s32.totalorder %s49, %s52
    %p61 = scmp.eq.s32.totalorder %s18, 1
    %p62 = por %p60, %p61
    %p63 = scmp.ne.s32.totalorder %s52, %s53
    %p64 = scmp.eq.s32.totalorder %s18, 0
    %p65 = por %p63, %p64
    %p66 = scmp.ne.s32.totalorder %s52, %s53
    %p67 = scmp.eq.s32.totalorder %s19, 1
    %p68 = por %p66, %p67
    %p70 = scmp.ne.s32.totalorder %s53, %s69
    %p71 = scmp.eq.s32.totalorder %s19, 0
    %p72 = por %p70, %p71
    %s74 = sadd.s32 %s73, 1
    %p77 = scmp.eq.s32.totalorder %s13, 1
    %p78 = scmp.ne.s32.totalorder %s73, %s75
    %p79 = scmp.eq.s32.totalorder %s13, 0
    %p80 = por %p78, %p79
    %p81 = scmp.ne.s32.totalorder %s73, %s75
    %p82 = scmp.eq.s32.totalorder %s18, 1
    %p83 = por %p81, %p82
    %p84 = scmp.ne.s32.totalorder %s75, %s76
    %p85 = scmp.eq.s32.totalorder %s18, 0
    %p86 = por %p84, %p85
    %p87 = scmp.ne.s32.totalorder %s75, %s76
    %p88 = scmp.eq.s32.totalorder %s19, 1
    %p89 = por %p87, %p88
    %p91 = scmp.ne.s32.totalorder %s76, %s90
    %p92 = scmp.eq.s32.totalorder %s19, 0
    %p93 = por %p91, %p92
    %s95 = sadd.s32 %s94, 1
    %p98 = scmp.eq.s32.totalorder %s13, 1
    %p99 = scmp.ne.s32.totalorder %s94, %s96
    %p100 = scmp.eq.s32.totalorder %s13, 0
    %p101 = por %p99, %p100
    %p102 = scmp.ne.s32.totalorder %s94, %s96
    %p103 = scmp.eq.s32.totalorder %s18, 1
    %p104 = por %p102, %p103
    %p105 = scmp.ne.s32.totalorder %s96, %s97
    %p106 = scmp.eq.s32.totalorder %s18, 0
    %p107 = por %p105, %p106
    %p108 = scmp.ne.s32.totalorder %s96, %s97
    %p109 = scmp.eq.s32.totalorder %s19, 1
    %p110 = por %p108, %p109
    %p112 = scmp.ne.s32.totalorder %s97, %s111
    %p113 = scmp.eq.s32.totalorder %s19, 0
    %p114 = por %p112, %p113
    %s116 = sadd.s32 %s115, 1
    %p119 = scmp.eq.s32.totalorder %s13, 1
    %p120 = scmp.ne.s32.totalorder %s115, %s117
    %p121 = scmp.eq.s32.totalorder %s13, 0
    %p122 = por %p120, %p121
    %p123 = scmp.ne.s32.totalorder %s115, %s117
    %p124 = scmp.eq.s32.totalorder %s18, 1
    %p125 = por %p123, %p124
    %p126 = scmp.ne.s32.totalorder %s117, %s118
    %p127 = scmp.eq.s32.totalorder %s18, 0
    %p128 = por %p126, %p127
    %p129 = scmp.ne.s32.totalorder %s117, %s118
    %p130 = scmp.eq.s32.totalorder %s19, 1
    %p131 = por %p129, %p130
    %p133 = scmp.ne.s32.totalorder %s118, %s132
    %p134 = scmp.eq.s32.totalorder %s19, 0
    %p135 = por %p133, %p134
    %s137 = sadd.s32 %s136, 1
    %p140 = scmp.eq.s32.totalorder %s13, 1
    %p141 = scmp.ne.s32.totalorder %s136, %s138
    %p142 = scmp.eq.s32.totalorder %s13, 0
    %p143 = por %p141, %p142
    %p144 = scmp.ne.s32.totalorder %s136, %s138
    %p145 = scmp.eq.s32.totalorder %s18, 1
    %p146 = por %p144, %p145
    %p147 = scmp.ne.s32.totalorder %s138, %s139
    %p148 = scmp.eq.s32.totalorder %s18, 0
    %p149 = por %p147, %p148
    %p150 = scmp.ne.s32.totalorder %s138, %s139
    %p151 = scmp.eq.s32.totalorder %s19, 1
    %p152 = por %p150, %p151
    %p154 = scmp.ne.s32.totalorder %s139, %s153
    %p155 = scmp.eq.s32.totalorder %s19, 0
    %p156 = por %p154, %p155
    %s158 = sadd.s32 %s157, 1
    %p161 = scmp.eq.s32.totalorder %s13, 1
    %p162 = scmp.ne.s32.totalorder %s157, %s159
    %p163 = scmp.eq.s32.totalorder %s13, 0
    %p164 = por %p162, %p163
    %p165 = scmp.ne.s32.totalorder %s157, %s159
    %p166 = scmp.eq.s32.totalorder %s18, 1
    %p167 = por %p165, %p166
    %p168 = scmp.ne.s32.totalorder %s159, %s160
    %p169 = scmp.eq.s32.totalorder %s18, 0
    %p170 = por %p168, %p169
    %p171 = scmp.ne.s32.totalorder %s159, %s160
    %p172 = scmp.eq.s32.totalorder %s19, 1
    %p173 = por %p171, %p172
    %p175 = scmp.ne.s32.totalorder %s160, %s174
    %p176 = scmp.eq.s32.totalorder %s19, 0
    %p177 = por %p175, %p176
    %s178 = ssub.s32 %s13, %s20
    %p179 = scmp.eq.s32.totalorder %s178, 0
    %s181 = sadd.s32 %s180, 1
    %s182 = scalar_select %p179, %s180, %s181
    %p185 = pneg %p179
    %p186 = scmp.eq.s32.totalorder %s13, 1
    %p187 = por %p185, %p186
    %p188 = scmp.ne.s32.totalorder %s180, %s183
    %p189 = scmp.eq.s32.totalorder %s13, 0
    %p190 = por %p188, %p189
    %p191 = scmp.ne.s32.totalorder %s180, %s183
    %p192 = scmp.eq.s32.totalorder %s18, 1
    %p193 = por %p191, %p192
    %p194 = scmp.ne.s32.totalorder %s183, %s184
    %p195 = scmp.eq.s32.totalorder %s18, 0
    %p196 = por %p194, %p195
    %p197 = scmp.ne.s32.totalorder %s183, %s184
    %p198 = scmp.eq.s32.totalorder %s19, 1
    %p199 = por %p197, %p198
    %p201 = scmp.ne.s32.totalorder %s184, %s200
    %p202 = scmp.eq.s32.totalorder %s19, 0
    %p203 = por %p201, %p202
    %p204 = scmp.le.s32.totalorder 1, %s13
    %p205 = scmp.lt.s32.totalorder %s13, 3
    %p206 = pnand %p204, %p205
    %p207 = pneg %p206
    // Predicated region
    $region9: #{dlgm_forward.1} parent=5 // pred_check
      _
    $region10: #{dlgm_forward.1} parent=5 // pred_check_branch
      %209 = sbr.rel (%p206) target = $region12
    $region11: #{dlgm_forward.1} parent=5 // pred_region
      %s210 = ssub.s32 %s13, 1
      // Predicated region
      $region13: #{dlgm_forward.1} parent=11 // pred_check
        %p211 = pneg %p86
      $region14: #{dlgm_forward.1} parent=11 // pred_check_branch
        %213 = sbr.rel (%p211) target = $region16
      $region15: #{dlgm_forward.1} parent=11 // pred_region
        _
      $region16: #{dlgm_forward.1} parent=11 // pred_fallthru
        _
      // Predicated region
      $region17: #{dlgm_forward.1} parent=11 // pred_check
        %p214 = pneg %p107
      $region18: #{dlgm_forward.1} parent=11 // pred_check_branch
        %216 = sbr.rel (%p214) target = $region20
      $region19: #{dlgm_forward.1} parent=11 // pred_region
        _
      $region20: #{dlgm_forward.1} parent=11 // pred_fallthru
        _
      // Predicated region
      $region21: #{dlgm_forward.1} parent=11 // pred_check
        %p217 = pneg %p128
      $region22: #{dlgm_forward.1} parent=11 // pred_check_branch
        %219 = sbr.rel (%p217) target = $region24
      $region23: #{dlgm_forward.1} parent=11 // pred_region
        _
      $region24: #{dlgm_forward.1} parent=11 // pred_fallthru
        _
      // Predicated region
      $region25: #{dlgm_forward.1} parent=11 // pred_check
        %p220 = pneg %p149
      $region26: #{dlgm_forward.1} parent=11 // pred_check_branch
        %222 = sbr.rel (%p220) target = $region28
      $region27: #{dlgm_forward.1} parent=11 // pred_region
        _
      $region28: #{dlgm_forward.1} parent=11 // pred_fallthru
        _
      // Predicated region
      $region29: #{dlgm_forward.1} parent=11 // pred_check
        %p223 = pneg %p170
      $region30: #{dlgm_forward.1} parent=11 // pred_check_branch
        %225 = sbr.rel (%p223) target = $region32
      $region31: #{dlgm_forward.1} parent=11 // pred_region
        _
      $region32: #{dlgm_forward.1} parent=11 // pred_fallthru
        _
    $region12: #{dlgm_forward.1} parent=5 // pred_fallthru
      _
    %p226 = scmp.lt.s32.totalorder %s13, 2
    // Predicated region
    $region33: #{dlgm_forward.1} parent=5 // pred_check
      %p227 = pneg %p226
    $region34: #{dlgm_forward.1} parent=5 // pred_check_branch
      %229 = sbr.rel (%p227) target = $region36
    $region35: #{dlgm_forward.1} parent=5 // pred_region
      // Predicated region
      $region37: #{dlgm_forward.1} parent=35 // pred_check
        %p230 = pneg %p33
      $region38: #{dlgm_forward.1} parent=35 // pred_check_branch
        %232 = sbr.rel (%p230) target = $region40
      $region39: #{dlgm_forward.1} parent=35 // pred_region
        %s233 = smul.u32 32, %s13
        %p234 = scmp.lt.s32.totalorder %s233, 63
        %s235 = scalar_select %p234, %s233, 63
        %s236 = smul.addr %s235, 8
        %s237 = scalar_lea.vmem %s0, %s236
        %s238 = smul.u32 32, %s13
      $region40: #{dlgm_forward.1} parent=35 // pred_fallthru
        _
      // Predicated region
      $region41: #{dlgm_forward.1} parent=35 // pred_check
        %p239 = pneg %p59
      $region42: #{dlgm_forward.1} parent=35 // pred_check_branch
        %241 = sbr.rel (%p239) target = $region44
      $region43: #{dlgm_forward.1} parent=35 // pred_region
        %s242 = smul.u32 32, %s13
        %p243 = scmp.lt.s32.totalorder %s242, 63
        %s244 = scalar_select %p243, %s242, 63
        %s245 = smul.addr %s244, 8
        %s246 = scalar_lea.vmem %s1, %s245
        %s247 = smul.u32 32, %s13
      $region44: #{dlgm_forward.1} parent=35 // pred_fallthru
        _
    $region36: #{dlgm_forward.1} parent=5 // pred_fallthru
      _
    %p248 = scmp.le.s32.totalorder 1, %s13
    %p249 = scmp.lt.s32.totalorder %s13, 3
    %p250 = pnand %p248, %p249
    %p251 = pneg %p250
    // Predicated region
    $region45: #{dlgm_forward.1} parent=5 // pred_check
      _
    $region46: #{dlgm_forward.1} parent=5 // pred_check_branch
      %253 = sbr.rel (%p250) target = $region48
    $region47: #{dlgm_forward.1} parent=5 // pred_region
      %s254 = ssub.s32 %s13, 1
      %s255 = smul.u32 32, %s18
      %p256 = scmp.lt.s32.totalorder %s255, 63
      %s257 = scalar_select %p256, %s255, 63
      %s258 = smul.addr %s257, 8
      %s259 = scalar_lea.vmem %s0, %s258
      %p260 = pneg %p39
      %p261 = pneg %p36
      %s262 = smul.u32 32, %s18
      %p263 = scmp.lt.s32.totalorder %s262, 63
      %s264 = scalar_select %p263, %s262, 63
      %s265 = smul.addr %s264, 8
      %s266 = scalar_lea.vmem %s1, %s265
      %p267 = pneg %p65
      %p268 = pneg %p62
      %p269 = pneg %p86
      %p270 = pneg %p83
      %p271 = pneg %p107
      %p272 = pneg %p104
      %p273 = pneg %p128
      %p274 = pneg %p125
      %p275 = pneg %p149
      %p276 = pneg %p146
      %p277 = pneg %p170
      %p278 = pneg %p167
      %p279 = pneg %p196
      %p280 = pneg %p193
      %s281 = smul.u32 32, %s18
      %p282 = scmp.lt.s32.totalorder %s281, 63
      %s283 = scalar_select %p282, %s281, 63
      %s284 = smul.addr %s283, 8
      %s285 = scalar_lea.vmem %s7, %s284
      %s286 = smul.u32 32, %s18
      %p287 = scmp.lt.s32.totalorder %s286, 63
      %s288 = scalar_select %p287, %s286, 63
      %s289 = smul.addr %s288, 8
      %s290 = scalar_lea.vmem %s0, %s289
      %s291 = smul.u32 32, %s18
      %s292 = smul.u32 32, %s18
      %p293 = scmp.lt.s32.totalorder %s292, 63
      %s294 = scalar_select %p293, %s292, 63
      %s295 = smul.addr %s294, 8
      %s296 = scalar_lea.vmem %s1, %s295
      %s297 = smul.u32 32, %s18
      %s298 = smul.u32 32, %s18
      %p299 = scmp.lt.s32.totalorder %s298, 63
      %s300 = scalar_select %p299, %s298, 63
      %s301 = smul.addr %s300, 8
      %s302 = scalar_lea.vmem %s7, %s301
      %s303 = smul.u32 32, %s18
      %v305 = vld [vmem:[%s290] sm:$0xff]
      %v306 = vld [vmem:[%s290 + $0x8] sm:$0xff]
      %v307 = vld [vmem:[%s290 + $0x10] sm:$0xff]
      %v308 = vld [vmem:[%s290 + $0x18] sm:$0xff]
      %v309 = vld [vmem:[%s290 + $0x20] sm:$0xff]
      %v310 = vld [vmem:[%s290 + $0x28] sm:$0xff]
      %v311 = vld [vmem:[%s290 + $0x30] sm:$0xff]
      %v312 = vld [vmem:[%s290 + $0x38] sm:$0xff]
      %v313 = vld [vmem:[%s290 + $0x40] sm:$0xff]
      %v314 = vld [vmem:[%s290 + $0x48] sm:$0xff]
      %v315 = vld [vmem:[%s290 + $0x50] sm:$0xff]
      %v316 = vld [vmem:[%s290 + $0x58] sm:$0xff]
      %v317 = vld [vmem:[%s290 + $0x60] sm:$0xff]
      %v318 = vld [vmem:[%s290 + $0x68] sm:$0xff]
      %v319 = vld [vmem:[%s290 + $0x70] sm:$0xff]
      %v320 = vld [vmem:[%s290 + $0x78] sm:$0xff]
      %v321 = vld [vmem:[%s290 + $0x80] sm:$0xff]
      %v322 = vld [vmem:[%s290 + $0x88] sm:$0xff]
      %v323 = vld [vmem:[%s290 + $0x90] sm:$0xff]
      %v324 = vld [vmem:[%s290 + $0x98] sm:$0xff]
      %v325 = vld [vmem:[%s290 + $0xa0] sm:$0xff]
      %v326 = vld [vmem:[%s290 + $0xa8] sm:$0xff]
      %v327 = vld [vmem:[%s290 + $0xb0] sm:$0xff]
      %v328 = vld [vmem:[%s290 + $0xb8] sm:$0xff]
      %v329 = vld [vmem:[%s290 + $0xc0] sm:$0xff]
      %v330 = vld [vmem:[%s290 + $0xc8] sm:$0xff]
      %v331 = vld [vmem:[%s290 + $0xd0] sm:$0xff]
      %v332 = vld [vmem:[%s290 + $0xd8] sm:$0xff]
      %v333 = vld [vmem:[%s290 + $0xe0] sm:$0xff]
      %v334 = vld [vmem:[%s290 + $0xe8] sm:$0xff]
      %v335 = vld [vmem:[%s290 + $0xf0] sm:$0xff]
      %v336 = vld [vmem:[%s290 + $0xf8] sm:$0xff]
      %v337 = vpack.c.bf16 %v306, %v305
      %v338 = vpack.c.bf16 %v308, %v307
      %v339 = vpack.c.bf16 %v310, %v309
      %v340 = vpack.c.bf16 %v312, %v311
      %v341 = vpack.c.bf16 %v314, %v313
      %v342 = vpack.c.bf16 %v316, %v315
      %v343 = vpack.c.bf16 %v318, %v317
      %v344 = vpack.c.bf16 %v320, %v319
      %v345 = vpack.c.bf16 %v322, %v321
      %v346 = vpack.c.bf16 %v324, %v323
      %v347 = vpack.c.bf16 %v326, %v325
      %v348 = vpack.c.bf16 %v328, %v327
      %v349 = vpack.c.bf16 %v330, %v329
      %v350 = vpack.c.bf16 %v332, %v331
      %v351 = vpack.c.bf16 %v334, %v333
      %v352 = vpack.c.bf16 %v336, %v335
      %v353 = vld [vmem:[%s2] sm:$0xf]
      %v354 = vld [vmem:[%s2 + $0x4] sm:$0xf]
      %v355 = vld [vmem:[%s6] sm:$0x1]
      %v357 = vlaneseq
      %v358 = vshrl.u32 %v357, 7
      %v359 = vsub.s32 0, %v358
      %v360 = vrot.slane %v355, %v359
      %v364 = vunpack.c.l.b16 %v353
      %v365 = vunpack.c.l.b16 %v354
      %v366 = vpack.c.b16 %v365, %v364
      %vm368 = vcmask 130048
      %v370 = vsel %vm368, %v337, 0
      %v373 = vsel %vm368, %v338, 0
      %v376 = vsel %vm368, %v339, 0
      %v379 = vsel %vm368, %v340, 0
      %v382 = vsel %vm368, %v341, 0
      %v385 = vsel %vm368, %v342, 0
      %v388 = vsel %vm368, %v343, 0
      %v391 = vsel %vm368, %v344, 0
      %v394 = vsel %vm368, %v345, 0
      %v397 = vsel %vm368, %v346, 0
      %v400 = vsel %vm368, %v347, 0
      %v403 = vsel %vm368, %v348, 0
      %v406 = vsel %vm368, %v349, 0
      %v409 = vsel %vm368, %v350, 0
      %v412 = vsel %vm368, %v351, 0
      %v415 = vsel %vm368, %v352, 0
      %417 = vmatprep.subr.bf16.mxu0 0
      %418 = vmatpush1.bf16.msra.mxu0 %v366
      %419 = vmatprep.subr.bf16.mxu0 0
      %420 = vmatpush1.bf16.msra.mxu0 0
      %421 = vmatprep.subr.bf16.mxu0 0
      %422 = vmatpush1.bf16.msra.mxu0 0
      %423 = vmatprep.subr.bf16.mxu0 0
      %424 = vmatpush1.bf16.msra.mxu0 0
      %425 = vmatprep.subr.bf16.mxu0 0
      %426 = vmatpush1.bf16.msra.mxu0 0
      %427 = vmatprep.subr.bf16.mxu0 0
      %428 = vmatpush1.bf16.msra.mxu0 0
      %429 = vmatprep.subr.bf16.mxu0 0
      %430 = vmatpush1.bf16.msra.mxu0 0
      %431 = vmatprep.subr.bf16.mxu0 0
      %432 = vmatpush1.bf16.msra.mxu0 0
      %433 = vmatprep.subr.bf16.mxu0 0
      %434 = vmatpush1.bf16.msra.mxu0 0
      %435 = vmatprep.subr.bf16.mxu0 0
      %436 = vmatpush1.bf16.msra.mxu0 0
      %437 = vmatprep.subr.bf16.mxu0 0
      %438 = vmatpush1.bf16.msra.mxu0 0
      %439 = vmatprep.subr.bf16.mxu0 0
      %440 = vmatpush1.bf16.msra.mxu0 0
      %441 = vmatprep.subr.bf16.mxu0 0
      %442 = vmatpush1.bf16.msra.mxu0 0
      %443 = vmatprep.subr.bf16.mxu0 0
      %444 = vmatpush1.bf16.msra.mxu0 0
      %445 = vmatprep.subr.bf16.mxu0 0
      %446 = vmatpush1.bf16.msra.mxu0 0
      %447 = vmatprep.subr.bf16.mxu0 0
      %448 = vmatpush1.bf16.msra.mxu0 0
      %449 = vmatprep.mubr.bf16.mxu0 0
      %450 = vmatmul.mubr.bf16.gmra.mrb[0].mxu0 %v370
      %v451 = vpop.f32.mrb[0].mxu0
      %v452 = vadd.f32 %v360, %v451
      %v453 = vpop.f32.mrb[0].mxu0
      %v454 = vpop.f32.mrb[0].mxu0
      %v455 = vadd.f32 %v360, %v454
      %v456 = vpop.f32.mrb[0].mxu0
      %457 = vmatprep.mubr.bf16.mxu0 0
      %458 = vmatmul.mubr.bf16.gmra.mrb[0].mxu0 %v373
      %v459 = vpop.f32.mrb[0].mxu0
      %v460 = vadd.f32 %v360, %v459
      %v461 = vpop.f32.mrb[0].mxu0
      %v462 = vpop.f32.mrb[0].mxu0
      %v463 = vadd.f32 %v360, %v462
      %v464 = vpop.f32.mrb[0].mxu0
      %465 = vmatprep.mubr.bf16.mxu0 0
      %466 = vmatmul.mubr.bf16.gmra.mrb[0].mxu0 %v376
      %v467 = vpop.f32.mrb[0].mxu0
      %v468 = vadd.f32 %v360, %v467
      %v469 = vpop.f32.mrb[0].mxu0
      %v470 = vpop.f32.mrb[0].mxu0
      %v471 = vadd.f32 %v360, %v470
      %v472 = vpop.f32.mrb[0].mxu0
      %473 = vmatprep.mubr.bf16.mxu0 0
      %474 = vmatmul.mubr.bf16.gmra.mrb[0].mxu0 %v379
      %v475 = vpop.f32.mrb[0].mxu0
      %v476 = vadd.f32 %v360, %v475
      %v477 = vpop.f32.mrb[0].mxu0
      %v478 = vpop.f32.mrb[0].mxu0
      %v479 = vadd.f32 %v360, %v478
      %v480 = vpop.f32.mrb[0].mxu0
      %481 = vmatprep.mubr.bf16.mxu0 0
      %482 = vmatmul.mubr.bf16.gmra.mrb[0].mxu0 %v382
      %v483 = vpop.f32.mrb[0].mxu0
      %v484 = vadd.f32 %v360, %v483
      %v485 = vpop.f32.mrb[0].mxu0
      %v486 = vpop.f32.mrb[0].mxu0
      %v487 = vadd.f32 %v360, %v486
      %v488 = vpop.f32.mrb[0].mxu0
      %489 = vmatprep.mubr.bf16.mxu0 0
      %490 = vmatmul.mubr.bf16.gmra.mrb[0].mxu0 %v385
      %v491 = vpop.f32.mrb[0].mxu0
      %v492 = vadd.f32 %v360, %v491
      %v493 = vpop.f32.mrb[0].mxu0
      %v494 = vpop.f32.mrb[0].mxu0
      %v495 = vadd.f32 %v360, %v494
      %v496 = vpop.f32.mrb[0].mxu0
      %497 = vmatprep.mubr.bf16.mxu0 0
      %498 = vmatmul.mubr.bf16.gmra.mrb[0].mxu0 %v388
      %v499 = vpop.f32.mrb[0].mxu0
      %v500 = vadd.f32 %v360, %v499
      %v501 = vpop.f32.mrb[0].mxu0
      %v502 = vpop.f32.mrb[0].mxu0
      %v503 = vadd.f32 %v360, %v502
      %v504 = vpop.f32.mrb[0].mxu0
      %505 = vmatprep.mubr.bf16.mxu0 0
      %506 = vmatmul.mubr.bf16.gmra.mrb[0].mxu0 %v391
      %v507 = vpop.f32.mrb[0].mxu0
      %v508 = vadd.f32 %v360, %v507
      %v509 = vpop.f32.mrb[0].mxu0
      %v510 = vpop.f32.mrb[0].mxu0
      %v511 = vadd.f32 %v360, %v510
      %v512 = vpop.f32.mrb[0].mxu0
      %513 = vmatprep.mubr.bf16.mxu0 0
      %514 = vmatmul.mubr.bf16.gmra.mrb[0].mxu0 %v394
      %v515 = vpop.f32.mrb[0].mxu0
      %v516 = vadd.f32 %v360, %v515
      %v517 = vpop.f32.mrb[0].mxu0
      %v518 = vpop.f32.mrb[0].mxu0
      %v519 = vadd.f32 %v360, %v518
      %v520 = vpop.f32.mrb[0].mxu0
      %521 = vmatprep.mubr.bf16.mxu0 0
      %522 = vmatmul.mubr.bf16.gmra.mrb[0].mxu0 %v397
      %v523 = vpop.f32.mrb[0].mxu0
      %v524 = vadd.f32 %v360, %v523
      %v525 = vpop.f32.mrb[0].mxu0
      %v526 = vpop.f32.mrb[0].mxu0
      %v527 = vadd.f32 %v360, %v526
      %v528 = vpop.f32.mrb[0].mxu0
      %529 = vmatprep.mubr.bf16.mxu0 0
      %530 = vmatmul.mubr.bf16.gmra.mrb[0].mxu0 %v400
      %v531 = vpop.f32.mrb[0].mxu0
      %v532 = vadd.f32 %v360, %v531
      %v533 = vpop.f32.mrb[0].mxu0
      %v534 = vpop.f32.mrb[0].mxu0
      %v535 = vadd.f32 %v360, %v534
      %v536 = vpop.f32.mrb[0].mxu0
      %537 = vmatprep.mubr.bf16.mxu0 0
      %538 = vmatmul.mubr.bf16.gmra.mrb[0].mxu0 %v403
      %v539 = vpop.f32.mrb[0].mxu0
      %v540 = vadd.f32 %v360, %v539
      %v541 = vpop.f32.mrb[0].mxu0
      %v542 = vpop.f32.mrb[0].mxu0
      %v543 = vadd.f32 %v360, %v542
      %v544 = vpop.f32.mrb[0].mxu0
      %545 = vmatprep.mubr.bf16.mxu0 0
      %546 = vmatmul.mubr.bf16.gmra.mrb[0].mxu0 %v406
      %v547 = vpop.f32.mrb[0].mxu0
      %v548 = vadd.f32 %v360, %v547
      %v549 = vpop.f32.mrb[0].mxu0
      %v550 = vpop.f32.mrb[0].mxu0
      %v551 = vadd.f32 %v360, %v550
      %v552 = vpop.f32.mrb[0].mxu0
      %553 = vmatprep.mubr.bf16.mxu0 0
      %554 = vmatmul.mubr.bf16.gmra.mrb[0].mxu0 %v409
      %v555 = vpop.f32.mrb[0].mxu0
      %v556 = vadd.f32 %v360, %v555
      %v557 = vpop.f32.mrb[0].mxu0
      %v558 = vpop.f32.mrb[0].mxu0
      %v559 = vadd.f32 %v360, %v558
      %v560 = vpop.f32.mrb[0].mxu0
      %561 = vmatprep.mubr.bf16.mxu0 0
      %562 = vmatmul.mubr.bf16.gmra.mrb[0].mxu0 %v412
      %v563 = vpop.f32.mrb[0].mxu0
      %v564 = vadd.f32 %v360, %v563
      %v565 = vpop.f32.mrb[0].mxu0
      %v566 = vpop.f32.mrb[0].mxu0
      %v567 = vadd.f32 %v360, %v566
      %v568 = vpop.f32.mrb[0].mxu0
      %569 = vmatprep.mubr.bf16.mxu0 0
      %570 = vmatmul.mubr.bf16.gmra.mrb[0].mxu0 %v415
      %v571 = vpop.f32.mrb[0].mxu0
      %v572 = vadd.f32 %v360, %v571
      %v573 = vpop.f32.mrb[0].mxu0
      %v574 = vpop.f32.mrb[0].mxu0
      %v575 = vadd.f32 %v360, %v574
      %v576 = vpop.f32.mrb[0].mxu0
      %577 = vdwg.mxu0
      %v578 = vmax.f32 %v452, 0.0
      %v579 = vmax.f32 %v455, 0.0
      %v580 = vmax.f32 %v460, 0.0
      %v581 = vmax.f32 %v463, 0.0
      %v582 = vmax.f32 %v468, 0.0
      %v583 = vmax.f32 %v471, 0.0
      %v584 = vmax.f32 %v476, 0.0
      %v585 = vmax.f32 %v479, 0.0
      %v586 = vmax.f32 %v484, 0.0
      %v587 = vmax.f32 %v487, 0.0
      %v588 = vmax.f32 %v492, 0.0
      %v589 = vmax.f32 %v495, 0.0
      %v590 = vmax.f32 %v500, 0.0
      %v591 = vmax.f32 %v503, 0.0
      %v592 = vmax.f32 %v508, 0.0
      %v593 = vmax.f32 %v511, 0.0
      %v594 = vmax.f32 %v516, 0.0
      %v595 = vmax.f32 %v519, 0.0
      %v596 = vmax.f32 %v524, 0.0
      %v597 = vmax.f32 %v527, 0.0
      %v598 = vmax.f32 %v532, 0.0
      %v599 = vmax.f32 %v535, 0.0
      %v600 = vmax.f32 %v540, 0.0
      %v601 = vmax.f32 %v543, 0.0
      %v602 = vmax.f32 %v548, 0.0
      %v603 = vmax.f32 %v551, 0.0
      %v604 = vmax.f32 %v556, 0.0
      %v605 = vmax.f32 %v559, 0.0
      %v606 = vmax.f32 %v564, 0.0
      %v607 = vmax.f32 %v567, 0.0
      %v608 = vmax.f32 %v572, 0.0
      %v609 = vmax.f32 %v575, 0.0
      %v610 = vpack.c.bf16 %v579, %v578
      %v611 = vpack.c.bf16 %v581, %v580
      %v612 = vpack.c.bf16 %v583, %v582
      %v613 = vpack.c.bf16 %v585, %v584
      %v614 = vpack.c.bf16 %v587, %v586
      %v615 = vpack.c.bf16 %v589, %v588
      %v616 = vpack.c.bf16 %v591, %v590
      %v617 = vpack.c.bf16 %v593, %v592
      %v618 = vpack.c.bf16 %v595, %v594
      %v619 = vpack.c.bf16 %v597, %v596
      %v620 = vpack.c.bf16 %v599, %v598
      %v621 = vpack.c.bf16 %v601, %v600
      %v622 = vpack.c.bf16 %v603, %v602
      %v623 = vpack.c.bf16 %v605, %v604
      %v624 = vpack.c.bf16 %v607, %v606
      %v625 = vpack.c.bf16 %v609, %v608
      %v626 = vld [vmem:[%s3] sm:$0xf]
      %v627 = vld [vmem:[%s3 + $0x4] sm:$0xf]
      %v628 = vld [vmem:[%s3 + $0x8] sm:$0xf]
      %v629 = vld [vmem:[%s3 + $0xc] sm:$0xf]
      %v630 = vld [vmem:[%s3 + $0x10] sm:$0xf]
      %v631 = vld [vmem:[%s3 + $0x14] sm:$0xf]
      %v632 = vld [vmem:[%s3 + $0x18] sm:$0xf]
      %v633 = vld [vmem:[%s3 + $0x1c] sm:$0xf]
      %v634 = vld [vmem:[%s3 + $0x20] sm:$0xf]
      %v635 = vld [vmem:[%s3 + $0x24] sm:$0xf]
      %v636 = vld [vmem:[%s3 + $0x28] sm:$0xf]
      %v637 = vld [vmem:[%s3 + $0x2c] sm:$0xf]
      %v638 = vld [vmem:[%s3 + $0x30] sm:$0xf]
      %v639 = vld [vmem:[%s3 + $0x34] sm:$0xf]
      %v640 = vld [vmem:[%s3 + $0x38] sm:$0xf]
      %v641 = vld [vmem:[%s3 + $0x3c] sm:$0xf]
      %v642 = vld [vmem:[%s6 + $0x1] sm:$0x1]
      %v644 = vlaneseq
      %v645 = vshrl.u32 %v644, 7
      %v646 = vsub.s32 0, %v645
      %v647 = vrot.slane %v642, %v646
      %v665 = vunpack.c.l.b16 %v626
      %v666 = vunpack.c.l.b16 %v627
      %v667 = vunpack.c.l.b16 %v628
      %v668 = vunpack.c.l.b16 %v629
      %v669 = vunpack.c.l.b16 %v630
      %v670 = vunpack.c.l.b16 %v631
      %v671 = vunpack.c.l.b16 %v632
      %v672 = vunpack.c.l.b16 %v633
      %v673 = vunpack.c.l.b16 %v634
      %v674 = vunpack.c.l.b16 %v635
      %v675 = vunpack.c.l.b16 %v636
      %v676 = vunpack.c.l.b16 %v637
      %v677 = vunpack.c.l.b16 %v638
      %v678 = vunpack.c.l.b16 %v639
      %v679 = vunpack.c.l.b16 %v640
      %v680 = vunpack.c.l.b16 %v641
      %v681 = vpack.c.b16 %v666, %v665
      %v682 = vpack.c.b16 %v668, %v667
      %v683 = vpack.c.b16 %v670, %v669
      %v684 = vpack.c.b16 %v672, %v671
      %v685 = vpack.c.b16 %v674, %v673
      %v686 = vpack.c.b16 %v676, %v675
      %v687 = vpack.c.b16 %v678, %v677
      %v688 = vpack.c.b16 %v680, %v679
      %697 = vmatprep.subr.bf16.mxu0 0
      %698 = vmatpush1.bf16.msra.mxu0 %v681
      %699 = vmatprep.subr.bf16.mxu0 0
      %700 = vmatpush1.bf16.msra.mxu0 %v682
      %701 = vmatprep.subr.bf16.mxu0 0
      %702 = vmatpush1.bf16.msra.mxu0 %v683
      %703 = vmatprep.subr.bf16.mxu0 0
      %704 = vmatpush1.bf16.msra.mxu0 %v684
      %705 = vmatprep.subr.bf16.mxu0 0
      %706 = vmatpush1.bf16.msra.mxu0 %v685
      %707 = vmatprep.subr.bf16.mxu0 0
      %708 = vmatpush1.bf16.msra.mxu0 %v686
      %709 = vmatprep.subr.bf16.mxu0 0
      %710 = vmatpush1.bf16.msra.mxu0 %v687
      %711 = vmatprep.subr.bf16.mxu0 0
      %712 = vmatpush1.bf16.msra.mxu0 %v688
      %713 = vmatprep.subr.bf16.mxu0 0
      %714 = vmatpush1.bf16.msra.mxu0 0
      %715 = vmatprep.subr.bf16.mxu0 0
      %716 = vmatpush1.bf16.msra.mxu0 0
      %717 = vmatprep.subr.bf16.mxu0 0
      %718 = vmatpush1.bf16.msra.mxu0 0
      %719 = vmatprep.subr.bf16.mxu0 0
      %720 = vmatpush1.bf16.msra.mxu0 0
      %721 = vmatprep.subr.bf16.mxu0 0
      %722 = vmatpush1.bf16.msra.mxu0 0
      %723 = vmatprep.subr.bf16.mxu0 0
      %724 = vmatpush1.bf16.msra.mxu0 0
      %725 = vmatprep.subr.bf16.mxu0 0
      %726 = vmatpush1.bf16.msra.mxu0 0
      %727 = vmatprep.subr.bf16.mxu0 0
      %728 = vmatpush1.bf16.msra.mxu0 0
      %729 = vmatprep.mubr.bf16.mxu0 0
      %730 = vmatmul.mubr.bf16.gmra.mrb[0].mxu0 %v610
      %v731 = vpop.f32.mrb[0].mxu0
      %v732 = vadd.f32 %v647, %v731
      %v733 = vpop.f32.mrb[0].mxu0
      %v734 = vpop.f32.mrb[0].mxu0
      %v735 = vadd.f32 %v647, %v734
      %v736 = vpop.f32.mrb[0].mxu0
      %737 = vmatprep.mubr.bf16.mxu0 0
      %738 = vmatmul.mubr.bf16.gmra.mrb[0].mxu0 %v611
      %v739 = vpop.f32.mrb[0].mxu0
      %v740 = vadd.f32 %v647, %v739
      %v741 = vpop.f32.mrb[0].mxu0
      %v742 = vpop.f32.mrb[0].mxu0
      %v743 = vadd.f32 %v647, %v742
      %v744 = vpop.f32.mrb[0].mxu0
      %745 = vmatprep.mubr.bf16.mxu0 0
      %746 = vmatmul.mubr.bf16.gmra.mrb[0].mxu0 %v612
      %v747 = vpop.f32.mrb[0].mxu0
      %v748 = vadd.f32 %v647, %v747
      %v749 = vpop.f32.mrb[0].mxu0
      %v750 = vpop.f32.mrb[0].mxu0
      %v751 = vadd.f32 %v647, %v750
      %v752 = vpop.f32.mrb[0].mxu0
      %753 = vmatprep.mubr.bf16.mxu0 0
      %754 = vmatmul.mubr.bf16.gmra.mrb[0].mxu0 %v613
      %v755 = vpop.f32.mrb[0].mxu0
      %v756 = vadd.f32 %v647, %v755
      %v757 = vpop.f32.mrb[0].mxu0
      %v758 = vpop.f32.mrb[0].mxu0
      %v759 = vadd.f32 %v647, %v758
      %v760 = vpop.f32.mrb[0].mxu0
      %761 = vmatprep.mubr.bf16.mxu0 0
      %762 = vmatmul.mubr.bf16.gmra.mrb[0].mxu0 %v614
      %v763 = vpop.f32.mrb[0].mxu0
      %v764 = vadd.f32 %v647, %v763
      %v765 = vpop.f32.mrb[0].mxu0
      %v766 = vpop.f32.mrb[0].mxu0
      %v767 = vadd.f32 %v647, %v766
      %v768 = vpop.f32.mrb[0].mxu0
      %769 = vmatprep.mubr.bf16.mxu0 0
      %770 = vmatmul.mubr.bf16.gmra.mrb[0].mxu0 %v615
      %v771 = vpop.f32.mrb[0].mxu0
      %v772 = vadd.f32 %v647, %v771
      %v773 = vpop.f32.mrb[0].mxu0
      %v774 = vpop.f32.mrb[0].mxu0
      %v775 = vadd.f32 %v647, %v774
      %v776 = vpop.f32.mrb[0].mxu0
      %777 = vmatprep.mubr.bf16.mxu0 0
      %778 = vmatmul.mubr.bf16.gmra.mrb[0].mxu0 %v616
      %v779 = vpop.f32.mrb[0].mxu0
      %v780 = vadd.f32 %v647, %v779
      %v781 = vpop.f32.mrb[0].mxu0
      %v782 = vpop.f32.mrb[0].mxu0
      %v783 = vadd.f32 %v647, %v782
      %v784 = vpop.f32.mrb[0].mxu0
      %785 = vmatprep.mubr.bf16.mxu0 0
      %786 = vmatmul.mubr.bf16.gmra.mrb[0].mxu0 %v617
      %v787 = vpop.f32.mrb[0].mxu0
      %v788 = vadd.f32 %v647, %v787
      %v789 = vpop.f32.mrb[0].mxu0
      %v790 = vpop.f32.mrb[0].mxu0
      %v791 = vadd.f32 %v647, %v790
      %v792 = vpop.f32.mrb[0].mxu0
      %793 = vmatprep.mubr.bf16.mxu0 0
      %794 = vmatmul.mubr.bf16.gmra.mrb[0].mxu0 %v618
      %v795 = vpop.f32.mrb[0].mxu0
      %v796 = vadd.f32 %v647, %v795
      %v797 = vpop.f32.mrb[0].mxu0
      %v798 = vpop.f32.mrb[0].mxu0
      %v799 = vadd.f32 %v647, %v798
      %v800 = vpop.f32.mrb[0].mxu0
      %801 = vmatprep.mubr.bf16.mxu0 0
      %802 = vmatmul.mubr.bf16.gmra.mrb[0].mxu0 %v619
      %v803 = vpop.f32.mrb[0].mxu0
      %v804 = vadd.f32 %v647, %v803
      %v805 = vpop.f32.mrb[0].mxu0
      %v806 = vpop.f32.mrb[0].mxu0
      %v807 = vadd.f32 %v647, %v806
      %v808 = vpop.f32.mrb[0].mxu0
      %809 = vmatprep.mubr.bf16.mxu0 0
      %810 = vmatmul.mubr.bf16.gmra.mrb[0].mxu0 %v620
      %v811 = vpop.f32.mrb[0].mxu0
      %v812 = vadd.f32 %v647, %v811
      %v813 = vpop.f32.mrb[0].mxu0
      %v814 = vpop.f32.mrb[0].mxu0
      %v815 = vadd.f32 %v647, %v814
      %v816 = vpop.f32.mrb[0].mxu0
      %817 = vmatprep.mubr.bf16.mxu0 0
      %818 = vmatmul.mubr.bf16.gmra.mrb[0].mxu0 %v621
      %v819 = vpop.f32.mrb[0].mxu0
      %v820 = vadd.f32 %v647, %v819
      %v821 = vpop.f32.mrb[0].mxu0
      %v822 = vpop.f32.mrb[0].mxu0
      %v823 = vadd.f32 %v647, %v822
      %v824 = vpop.f32.mrb[0].mxu0
      %825 = vmatprep.mubr.bf16.mxu0 0
      %826 = vmatmul.mubr.bf16.gmra.mrb[0].mxu0 %v622
      %v827 = vpop.f32.mrb[0].mxu0
      %v828 = vadd.f32 %v647, %v827
      %v829 = vpop.f32.mrb[0].mxu0
      %v830 = vpop.f32.mrb[0].mxu0
      %v831 = vadd.f32 %v647, %v830
      %v832 = vpop.f32.mrb[0].mxu0
      %833 = vmatprep.mubr.bf16.mxu0 0
      %834 = vmatmul.mubr.bf16.gmra.mrb[0].mxu0 %v623
      %v835 = vpop.f32.mrb[0].mxu0
      %v836 = vadd.f32 %v647, %v835
      %v837 = vpop.f32.mrb[0].mxu0
      %v838 = vpop.f32.mrb[0].mxu0
      %v839 = vadd.f32 %v647, %v838
      %v840 = vpop.f32.mrb[0].mxu0
      %841 = vmatprep.mubr.bf16.mxu0 0
      %842 = vmatmul.mubr.bf16.gmra.mrb[0].mxu0 %v624
      %v843 = vpop.f32.mrb[0].mxu0
      %v844 = vadd.f32 %v647, %v843
      %v845 = vpop.f32.mrb[0].mxu0
      %v846 = vpop.f32.mrb[0].mxu0
      %v847 = vadd.f32 %v647, %v846
      %v848 = vpop.f32.mrb[0].mxu0
      %849 = vmatprep.mubr.bf16.mxu0 0
      %850 = vmatmul.mubr.bf16.gmra.mrb[0].mxu0 %v625
      %v851 = vpop.f32.mrb[0].mxu0
      %v852 = vadd.f32 %v647, %v851
      %v853 = vpop.f32.mrb[0].mxu0
      %v854 = vpop.f32.mrb[0].mxu0
      %v855 = vadd.f32 %v647, %v854
      %v856 = vpop.f32.mrb[0].mxu0
      %857 = vdwg.mxu0
      %v858 = vmax.f32 %v732, 0.0
      %v859 = vmax.f32 %v735, 0.0
      %v860 = vmax.f32 %v740, 0.0
      %v861 = vmax.f32 %v743, 0.0
      %v862 = vmax.f32 %v748, 0.0
      %v863 = vmax.f32 %v751, 0.0
      %v864 = vmax.f32 %v756, 0.0
      %v865 = vmax.f32 %v759, 0.0
      %v866 = vmax.f32 %v764, 0.0
      %v867 = vmax.f32 %v767, 0.0
      %v868 = vmax.f32 %v772, 0.0
      %v869 = vmax.f32 %v775, 0.0
      %v870 = vmax.f32 %v780, 0.0
      %v871 = vmax.f32 %v783, 0.0
      %v872 = vmax.f32 %v788, 0.0
      %v873 = vmax.f32 %v791, 0.0
      %v874 = vmax.f32 %v796, 0.0
      %v875 = vmax.f32 %v799, 0.0
      %v876 = vmax.f32 %v804, 0.0
      %v877 = vmax.f32 %v807, 0.0
      %v878 = vmax.f32 %v812, 0.0
      %v879 = vmax.f32 %v815, 0.0
      %v880 = vmax.f32 %v820, 0.0
      %v881 = vmax.f32 %v823, 0.0
      %v882 = vmax.f32 %v828, 0.0
      %v883 = vmax.f32 %v831, 0.0
      %v884 = vmax.f32 %v836, 0.0
      %v885 = vmax.f32 %v839, 0.0
      %v886 = vmax.f32 %v844, 0.0
      %v887 = vmax.f32 %v847, 0.0
      %v888 = vmax.f32 %v852, 0.0
      %v889 = vmax.f32 %v855, 0.0
      %v890 = vpack.c.bf16 %v859, %v858
      %v891 = vpack.c.bf16 %v861, %v860
      %v892 = vpack.c.bf16 %v863, %v862
      %v893 = vpack.c.bf16 %v865, %v864
      %v894 = vpack.c.bf16 %v867, %v866
      %v895 = vpack.c.bf16 %v869, %v868
      %v896 = vpack.c.bf16 %v871, %v870
      %v897 = vpack.c.bf16 %v873, %v872
      %v898 = vpack.c.bf16 %v875, %v874
      %v899 = vpack.c.bf16 %v877, %v876
      %v900 = vpack.c.bf16 %v879, %v878
      %v901 = vpack.c.bf16 %v881, %v880
      %v902 = vpack.c.bf16 %v883, %v882
      %v903 = vpack.c.bf16 %v885, %v884
      %v904 = vpack.c.bf16 %v887, %v886
      %v905 = vpack.c.bf16 %v889, %v888
      %v906 = vld [vmem:[%s4] sm:$0xf]
      %v907 = vld [vmem:[%s4 + $0x4] sm:$0xf]
      %v908 = vld [vmem:[%s4 + $0x8] sm:$0xf]
      %v909 = vld [vmem:[%s4 + $0xc] sm:$0xf]
      %v910 = vld [vmem:[%s4 + $0x10] sm:$0xf]
      %v911 = vld [vmem:[%s4 + $0x14] sm:$0xf]
      %v912 = vld [vmem:[%s4 + $0x18] sm:$0xf]
      %v913 = vld [vmem:[%s4 + $0x1c] sm:$0xf]
      %v914 = vld [vmem:[%s4 + $0x20] sm:$0xf]
      %v915 = vld [vmem:[%s4 + $0x24] sm:$0xf]
      %v916 = vld [vmem:[%s4 + $0x28] sm:$0xf]
      %v917 = vld [vmem:[%s4 + $0x2c] sm:$0xf]
      %v918 = vld [vmem:[%s4 + $0x30] sm:$0xf]
      %v919 = vld [vmem:[%s4 + $0x34] sm:$0xf]
      %v920 = vld [vmem:[%s4 + $0x38] sm:$0xf]
      %v921 = vld [vmem:[%s4 + $0x3c] sm:$0xf]
      %v922 = vld [vmem:[%s296] sm:$0xff]
      %v923 = vld [vmem:[%s296 + $0x8] sm:$0xff]
      %v924 = vld [vmem:[%s296 + $0x10] sm:$0xff]
      %v925 = vld [vmem:[%s296 + $0x18] sm:$0xff]
      %v926 = vld [vmem:[%s296 + $0x20] sm:$0xff]
      %v927 = vld [vmem:[%s296 + $0x28] sm:$0xff]
      %v928 = vld [vmem:[%s296 + $0x30] sm:$0xff]
      %v929 = vld [vmem:[%s296 + $0x38] sm:$0xff]
      %v930 = vld [vmem:[%s296 + $0x40] sm:$0xff]
      %v931 = vld [vmem:[%s296 + $0x48] sm:$0xff]
      %v932 = vld [vmem:[%s296 + $0x50] sm:$0xff]
      %v933 = vld [vmem:[%s296 + $0x58] sm:$0xff]
      %v934 = vld [vmem:[%s296 + $0x60] sm:$0xff]
      %v935 = vld [vmem:[%s296 + $0x68] sm:$0xff]
      %v936 = vld [vmem:[%s296 + $0x70] sm:$0xff]
      %v937 = vld [vmem:[%s296 + $0x78] sm:$0xff]
      %v938 = vld [vmem:[%s296 + $0x80] sm:$0xff]
      %v939 = vld [vmem:[%s296 + $0x88] sm:$0xff]
      %v940 = vld [vmem:[%s296 + $0x90] sm:$0xff]
      %v941 = vld [vmem:[%s296 + $0x98] sm:$0xff]
      %v942 = vld [vmem:[%s296 + $0xa0] sm:$0xff]
      %v943 = vld [vmem:[%s296 + $0xa8] sm:$0xff]
      %v944 = vld [vmem:[%s296 + $0xb0] sm:$0xff]
      %v945 = vld [vmem:[%s296 + $0xb8] sm:$0xff]
      %v946 = vld [vmem:[%s296 + $0xc0] sm:$0xff]
      %v947 = vld [vmem:[%s296 + $0xc8] sm:$0xff]
      %v948 = vld [vmem:[%s296 + $0xd0] sm:$0xff]
      %v949 = vld [vmem:[%s296 + $0xd8] sm:$0xff]
      %v950 = vld [vmem:[%s296 + $0xe0] sm:$0xff]
      %v951 = vld [vmem:[%s296 + $0xe8] sm:$0xff]
      %v952 = vld [vmem:[%s296 + $0xf0] sm:$0xff]
      %v953 = vld [vmem:[%s296 + $0xf8] sm:$0xff]
      %v954 = vpack.c.bf16 %v923, %v922
      %v955 = vpack.c.bf16 %v925, %v924
      %v956 = vpack.c.bf16 %v927, %v926
      %v957 = vpack.c.bf16 %v929, %v928
      %v958 = vpack.c.bf16 %v931, %v930
      %v959 = vpack.c.bf16 %v933, %v932
      %v960 = vpack.c.bf16 %v935, %v934
      %v961 = vpack.c.bf16 %v937, %v936
      %v962 = vpack.c.bf16 %v939, %v938
      %v963 = vpack.c.bf16 %v941, %v940
      %v964 = vpack.c.bf16 %v943, %v942
      %v965 = vpack.c.bf16 %v945, %v944
      %v966 = vpack.c.bf16 %v947, %v946
      %v967 = vpack.c.bf16 %v949, %v948
      %v968 = vpack.c.bf16 %v951, %v950
      %v969 = vpack.c.bf16 %v953, %v952
      %v970 = vld [vmem:[%s5] sm:$0xf]
      %v971 = vld [vmem:[%s5 + $0x4] sm:$0xf]
      %v974 = vunpack.c.l.b16 %v970
      %v975 = vunpack.c.l.b16 %v971
      %v976 = vpack.c.b16 %v975, %v974
      %v979 = vsel %vm368, %v954, 0
      %v982 = vsel %vm368, %v955, 0
      %v985 = vsel %vm368, %v956, 0
      %v988 = vsel %vm368, %v957, 0
      %v991 = vsel %vm368, %v958, 0
      %v994 = vsel %vm368, %v959, 0
      %v997 = vsel %vm368, %v960, 0
      %v1000 = vsel %vm368, %v961, 0
      %v1003 = vsel %vm368, %v962, 0
      %v1006 = vsel %vm368, %v963, 0
      %v1009 = vsel %vm368, %v964, 0
      %v1012 = vsel %vm368, %v965, 0
      %v1015 = vsel %vm368, %v966, 0
      %v1018 = vsel %vm368, %v967, 0
      %v1021 = vsel %vm368, %v968, 0
      %v1024 = vsel %vm368, %v969, 0
      %1026 = vmatprep.subr.bf16.mxu0 0
      %1027 = vmatpush1.bf16.msra.mxu0 %v976
      %1028 = vmatprep.subr.bf16.mxu0 0
      %1029 = vmatpush1.bf16.msra.mxu0 0
      %1030 = vmatprep.subr.bf16.mxu0 0
      %1031 = vmatpush1.bf16.msra.mxu0 0
      %1032 = vmatprep.subr.bf16.mxu0 0
      %1033 = vmatpush1.bf16.msra.mxu0 0
      %1034 = vmatprep.subr.bf16.mxu0 0
      %1035 = vmatpush1.bf16.msra.mxu0 0
      %1036 = vmatprep.subr.bf16.mxu0 0
      %1037 = vmatpush1.bf16.msra.mxu0 0
      %1038 = vmatprep.subr.bf16.mxu0 0
      %1039 = vmatpush1.bf16.msra.mxu0 0
      %1040 = vmatprep.subr.bf16.mxu0 0
      %1041 = vmatpush1.bf16.msra.mxu0 0
      %1042 = vmatprep.subr.bf16.mxu0 0
      %1043 = vmatpush1.bf16.msra.mxu0 0
      %1044 = vmatprep.subr.bf16.mxu0 0
      %1045 = vmatpush1.bf16.msra.mxu0 0
      %1046 = vmatprep.subr.bf16.mxu0 0
      %1047 = vmatpush1.bf16.msra.mxu0 0
      %1048 = vmatprep.subr.bf16.mxu0 0
      %1049 = vmatpush1.bf16.msra.mxu0 0
      %1050 = vmatprep.subr.bf16.mxu0 0
      %1051 = vmatpush1.bf16.msra.mxu0 0
      %1052 = vmatprep.subr.bf16.mxu0 0
      %1053 = vmatpush1.bf16.msra.mxu0 0
      %1054 = vmatprep.subr.bf16.mxu0 0
      %1055 = vmatpush1.bf16.msra.mxu0 0
      %1056 = vmatprep.subr.bf16.mxu0 0
      %1057 = vmatpush1.bf16.msra.mxu0 0
      %1058 = vmatprep.mubr.bf16.mxu0 0
      %1059 = vmatmul.mubr.bf16.gmra.mrb[0].mxu0 %v979
      %v1060 = vpop.f32.mrb[0].mxu0
      %v1061 = vadd.f32 0.0, %v1060
      %v1062 = vpop.f32.mrb[0].mxu0
      %v1063 = vpop.f32.mrb[0].mxu0
      %v1064 = vadd.f32 0.0, %v1063
      %v1065 = vpop.f32.mrb[0].mxu0
      %1066 = vmatprep.mubr.bf16.mxu0 0
      %1067 = vmatmul.mubr.bf16.gmra.mrb[0].mxu0 %v982
      %v1068 = vpop.f32.mrb[0].mxu0
      %v1069 = vadd.f32 0.0, %v1068
      %v1070 = vpop.f32.mrb[0].mxu0
      %v1071 = vpop.f32.mrb[0].mxu0
      %v1072 = vadd.f32 0.0, %v1071
      %v1073 = vpop.f32.mrb[0].mxu0
      %1074 = vmatprep.mubr.bf16.mxu0 0
      %1075 = vmatmul.mubr.bf16.gmra.mrb[0].mxu0 %v985
      %v1076 = vpop.f32.mrb[0].mxu0
      %v1077 = vadd.f32 0.0, %v1076
      %v1078 = vpop.f32.mrb[0].mxu0
      %v1079 = vpop.f32.mrb[0].mxu0
      %v1080 = vadd.f32 0.0, %v1079
      %v1081 = vpop.f32.mrb[0].mxu0
      %1082 = vmatprep.mubr.bf16.mxu0 0
      %1083 = vmatmul.mubr.bf16.gmra.mrb[0].mxu0 %v988
      %v1084 = vpop.f32.mrb[0].mxu0
      %v1085 = vadd.f32 0.0, %v1084
      %v1086 = vpop.f32.mrb[0].mxu0
      %v1087 = vpop.f32.mrb[0].mxu0
      %v1088 = vadd.f32 0.0, %v1087
      %v1089 = vpop.f32.mrb[0].mxu0
      %1090 = vmatprep.mubr.bf16.mxu0 0
      %1091 = vmatmul.mubr.bf16.gmra.mrb[0].mxu0 %v991
      %v1092 = vpop.f32.mrb[0].mxu0
      %v1093 = vadd.f32 0.0, %v1092
      %v1094 = vpop.f32.mrb[0].mxu0
      %v1095 = vpop.f32.mrb[0].mxu0
      %v1096 = vadd.f32 0.0, %v1095
      %v1097 = vpop.f32.mrb[0].mxu0
      %1098 = vmatprep.mubr.bf16.mxu0 0
      %1099 = vmatmul.mubr.bf16.gmra.mrb[0].mxu0 %v994
      %v1100 = vpop.f32.mrb[0].mxu0
      %v1101 = vadd.f32 0.0, %v1100
      %v1102 = vpop.f32.mrb[0].mxu0
      %v1103 = vpop.f32.mrb[0].mxu0
      %v1104 = vadd.f32 0.0, %v1103
      %v1105 = vpop.f32.mrb[0].mxu0
      %1106 = vmatprep.mubr.bf16.mxu0 0
      %1107 = vmatmul.mubr.bf16.gmra.mrb[0].mxu0 %v997
      %v1108 = vpop.f32.mrb[0].mxu0
      %v1109 = vadd.f32 0.0, %v1108
      %v1110 = vpop.f32.mrb[0].mxu0
      %v1111 = vpop.f32.mrb[0].mxu0
      %v1112 = vadd.f32 0.0, %v1111
      %v1113 = vpop.f32.mrb[0].mxu0
      %1114 = vmatprep.mubr.bf16.mxu0 0
      %1115 = vmatmul.mubr.bf16.gmra.mrb[0].mxu0 %v1000
      %v1116 = vpop.f32.mrb[0].mxu0
      %v1117 = vadd.f32 0.0, %v1116
      %v1118 = vpop.f32.mrb[0].mxu0
      %v1119 = vpop.f32.mrb[0].mxu0
      %v1120 = vadd.f32 0.0, %v1119
      %v1121 = vpop.f32.mrb[0].mxu0
      %1122 = vmatprep.mubr.bf16.mxu0 0
      %1123 = vmatmul.mubr.bf16.gmra.mrb[0].mxu0 %v1003
      %v1124 = vpop.f32.mrb[0].mxu0
      %v1125 = vadd.f32 0.0, %v1124
      %v1126 = vpop.f32.mrb[0].mxu0
      %v1127 = vpop.f32.mrb[0].mxu0
      %v1128 = vadd.f32 0.0, %v1127
      %v1129 = vpop.f32.mrb[0].mxu0
      %1130 = vmatprep.mubr.bf16.mxu0 0
      %1131 = vmatmul.mubr.bf16.gmra.mrb[0].mxu0 %v1006
      %v1132 = vpop.f32.mrb[0].mxu0
      %v1133 = vadd.f32 0.0, %v1132
      %v1134 = vpop.f32.mrb[0].mxu0
      %v1135 = vpop.f32.mrb[0].mxu0
      %v1136 = vadd.f32 0.0, %v1135
      %v1137 = vpop.f32.mrb[0].mxu0
      %1138 = vmatprep.mubr.bf16.mxu0 0
      %1139 = vmatmul.mubr.bf16.gmra.mrb[0].mxu0 %v1009
      %v1140 = vpop.f32.mrb[0].mxu0
      %v1141 = vadd.f32 0.0, %v1140
      %v1142 = vpop.f32.mrb[0].mxu0
      %v1143 = vpop.f32.mrb[0].mxu0
      %v1144 = vadd.f32 0.0, %v1143
      %v1145 = vpop.f32.mrb[0].mxu0
      %1146 = vmatprep.mubr.bf16.mxu0 0
      %1147 = vmatmul.mubr.bf16.gmra.mrb[0].mxu0 %v1012
      %v1148 = vpop.f32.mrb[0].mxu0
      %v1149 = vadd.f32 0.0, %v1148
      %v1150 = vpop.f32.mrb[0].mxu0
      %v1151 = vpop.f32.mrb[0].mxu0
      %v1152 = vadd.f32 0.0, %v1151
      %v1153 = vpop.f32.mrb[0].mxu0
      %1154 = vmatprep.mubr.bf16.mxu0 0
      %1155 = vmatmul.mubr.bf16.gmra.mrb[0].mxu0 %v1015
      %v1156 = vpop.f32.mrb[0].mxu0
      %v1157 = vadd.f32 0.0, %v1156
      %v1158 = vpop.f32.mrb[0].mxu0
      %v1159 = vpop.f32.mrb[0].mxu0
      %v1160 = vadd.f32 0.0, %v1159
      %v1161 = vpop.f32.mrb[0].mxu0
      %1162 = vmatprep.mubr.bf16.mxu0 0
      %1163 = vmatmul.mubr.bf16.gmra.mrb[0].mxu0 %v1018
      %v1164 = vpop.f32.mrb[0].mxu0
      %v1165 = vadd.f32 0.0, %v1164
      %v1166 = vpop.f32.mrb[0].mxu0
      %v1167 = vpop.f32.mrb[0].mxu0
      %v1168 = vadd.f32 0.0, %v1167
      %v1169 = vpop.f32.mrb[0].mxu0
      %1170 = vmatprep.mubr.bf16.mxu0 0
      %1171 = vmatmul.mubr.bf16.gmra.mrb[0].mxu0 %v1021
      %v1172 = vpop.f32.mrb[0].mxu0
      %v1173 = vadd.f32 0.0, %v1172
      %v1174 = vpop.f32.mrb[0].mxu0
      %v1175 = vpop.f32.mrb[0].mxu0
      %v1176 = vadd.f32 0.0, %v1175
      %v1177 = vpop.f32.mrb[0].mxu0
      %1178 = vmatprep.mubr.bf16.mxu0 0
      %1179 = vmatmul.mubr.bf16.gmra.mrb[0].mxu0 %v1024
      %v1180 = vpop.f32.mrb[0].mxu0
      %v1181 = vadd.f32 0.0, %v1180
      %v1182 = vpop.f32.mrb[0].mxu0
      %v1183 = vpop.f32.mrb[0].mxu0
      %v1184 = vadd.f32 0.0, %v1183
      %v1185 = vpop.f32.mrb[0].mxu0
      %1186 = vdwg.mxu0
      %v1203 = vunpack.c.l.b16 %v906
      %v1204 = vunpack.c.l.b16 %v907
      %v1205 = vunpack.c.l.b16 %v908
      %v1206 = vunpack.c.l.b16 %v909
      %v1207 = vunpack.c.l.b16 %v910
      %v1208 = vunpack.c.l.b16 %v911
      %v1209 = vunpack.c.l.b16 %v912
      %v1210 = vunpack.c.l.b16 %v913
      %v1211 = vunpack.c.l.b16 %v914
      %v1212 = vunpack.c.l.b16 %v915
      %v1213 = vunpack.c.l.b16 %v916
      %v1214 = vunpack.c.l.b16 %v917
      %v1215 = vunpack.c.l.b16 %v918
      %v1216 = vunpack.c.l.b16 %v919
      %v1217 = vunpack.c.l.b16 %v920
      %v1218 = vunpack.c.l.b16 %v921
      %v1219 = vpack.c.b16 %v1204, %v1203
      %v1220 = vpack.c.b16 %v1206, %v1205
      %v1221 = vpack.c.b16 %v1208, %v1207
      %v1222 = vpack.c.b16 %v1210, %v1209
      %v1223 = vpack.c.b16 %v1212, %v1211
      %v1224 = vpack.c.b16 %v1214, %v1213
      %v1225 = vpack.c.b16 %v1216, %v1215
      %v1226 = vpack.c.b16 %v1218, %v1217
      %1235 = vmatprep.subr.bf16.mxu0 0
      %1236 = vmatpush1.bf16.msra.mxu0 %v1219
      %1237 = vmatprep.subr.bf16.mxu0 0
      %1238 = vmatpush1.bf16.msra.mxu0 %v1220
      %1239 = vmatprep.subr.bf16.mxu0 0
      %1240 = vmatpush1.bf16.msra.mxu0 %v1221
      %1241 = vmatprep.subr.bf16.mxu0 0
      %1242 = vmatpush1.bf16.msra.mxu0 %v1222
      %1243 = vmatprep.subr.bf16.mxu0 0
      %1244 = vmatpush1.bf16.msra.mxu0 %v1223
      %1245 = vmatprep.subr.bf16.mxu0 0
      %1246 = vmatpush1.bf16.msra.mxu0 %v1224
      %1247 = vmatprep.subr.bf16.mxu0 0
      %1248 = vmatpush1.bf16.msra.mxu0 %v1225
      %1249 = vmatprep.subr.bf16.mxu0 0
      %1250 = vmatpush1.bf16.msra.mxu0 %v1226
      %1251 = vmatprep.subr.bf16.mxu0 0
      %1252 = vmatpush1.bf16.msra.mxu0 0
      %1253 = vmatprep.subr.bf16.mxu0 0
      %1254 = vmatpush1.bf16.msra.mxu0 0
      %1255 = vmatprep.subr.bf16.mxu0 0
      %1256 = vmatpush1.bf16.msra.mxu0 0
      %1257 = vmatprep.subr.bf16.mxu0 0
      %1258 = vmatpush1.bf16.msra.mxu0 0
      %1259 = vmatprep.subr.bf16.mxu0 0
      %1260 = vmatpush1.bf16.msra.mxu0 0
      %1261 = vmatprep.subr.bf16.mxu0 0
      %1262 = vmatpush1.bf16.msra.mxu0 0
      %1263 = vmatprep.subr.bf16.mxu0 0
      %1264 = vmatpush1.bf16.msra.mxu0 0
      %1265 = vmatprep.subr.bf16.mxu0 0
      %1266 = vmatpush1.bf16.msra.mxu0 0
      %1267 = vmatprep.mubr.bf16.mxu0 0
      %1268 = vmatmul.mubr.bf16.gmra.mrb[0].mxu0 %v890
      %v1269 = vpop.f32.mrb[0].mxu0
      %v1270 = vadd.f32 %v1061, %v1269
      %v1271 = vpop.f32.mrb[0].mxu0
      %v1272 = vpop.f32.mrb[0].mxu0
      %v1273 = vadd.f32 %v1064, %v1272
      %v1274 = vpop.f32.mrb[0].mxu0
      %1275 = vmatprep.mubr.bf16.mxu0 0
      %1276 = vmatmul.mubr.bf16.gmra.mrb[0].mxu0 %v891
      %v1277 = vpop.f32.mrb[0].mxu0
      %v1278 = vadd.f32 %v1069, %v1277
      %v1279 = vpop.f32.mrb[0].mxu0
      %v1280 = vpop.f32.mrb[0].mxu0
      %v1281 = vadd.f32 %v1072, %v1280
      %v1282 = vpop.f32.mrb[0].mxu0
      %1283 = vmatprep.mubr.bf16.mxu0 0
      %1284 = vmatmul.mubr.bf16.gmra.mrb[0].mxu0 %v892
      %v1285 = vpop.f32.mrb[0].mxu0
      %v1286 = vadd.f32 %v1077, %v1285
      %v1287 = vpop.f32.mrb[0].mxu0
      %v1288 = vpop.f32.mrb[0].mxu0
      %v1289 = vadd.f32 %v1080, %v1288
      %v1290 = vpop.f32.mrb[0].mxu0
      %1291 = vmatprep.mubr.bf16.mxu0 0
      %1292 = vmatmul.mubr.bf16.gmra.mrb[0].mxu0 %v893
      %v1293 = vpop.f32.mrb[0].mxu0
      %v1294 = vadd.f32 %v1085, %v1293
      %v1295 = vpop.f32.mrb[0].mxu0
      %v1296 = vpop.f32.mrb[0].mxu0
      %v1297 = vadd.f32 %v1088, %v1296
      %v1298 = vpop.f32.mrb[0].mxu0
      %1299 = vmatprep.mubr.bf16.mxu0 0
      %1300 = vmatmul.mubr.bf16.gmra.mrb[0].mxu0 %v894
      %v1301 = vpop.f32.mrb[0].mxu0
      %v1302 = vadd.f32 %v1093, %v1301
      %v1303 = vpop.f32.mrb[0].mxu0
      %v1304 = vpop.f32.mrb[0].mxu0
      %v1305 = vadd.f32 %v1096, %v1304
      %v1306 = vpop.f32.mrb[0].mxu0
      %1307 = vmatprep.mubr.bf16.mxu0 0
      %1308 = vmatmul.mubr.bf16.gmra.mrb[0].mxu0 %v895
      %v1309 = vpop.f32.mrb[0].mxu0
      %v1310 = vadd.f32 %v1101, %v1309
      %v1311 = vpop.f32.mrb[0].mxu0
      %v1312 = vpop.f32.mrb[0].mxu0
      %v1313 = vadd.f32 %v1104, %v1312
      %v1314 = vpop.f32.mrb[0].mxu0
      %1315 = vmatprep.mubr.bf16.mxu0 0
      %1316 = vmatmul.mubr.bf16.gmra.mrb[0].mxu0 %v896
      %v1317 = vpop.f32.mrb[0].mxu0
      %v1318 = vadd.f32 %v1109, %v1317
      %v1319 = vpop.f32.mrb[0].mxu0
      %v1320 = vpop.f32.mrb[0].mxu0
      %v1321 = vadd.f32 %v1112, %v1320
      %v1322 = vpop.f32.mrb[0].mxu0
      %1323 = vmatprep.mubr.bf16.mxu0 0
      %1324 = vmatmul.mubr.bf16.gmra.mrb[0].mxu0 %v897
      %v1325 = vpop.f32.mrb[0].mxu0
      %v1326 = vadd.f32 %v1117, %v1325
      %v1327 = vpop.f32.mrb[0].mxu0
      %v1328 = vpop.f32.mrb[0].mxu0
      %v1329 = vadd.f32 %v1120, %v1328
      %v1330 = vpop.f32.mrb[0].mxu0
      %1331 = vmatprep.mubr.bf16.mxu0 0
      %1332 = vmatmul.mubr.bf16.gmra.mrb[0].mxu0 %v898
      %v1333 = vpop.f32.mrb[0].mxu0
      %v1334 = vadd.f32 %v1125, %v1333
      %v1335 = vpop.f32.mrb[0].mxu0
      %v1336 = vpop.f32.mrb[0].mxu0
      %v1337 = vadd.f32 %v1128, %v1336
      %v1338 = vpop.f32.mrb[0].mxu0
      %1339 = vmatprep.mubr.bf16.mxu0 0
      %1340 = vmatmul.mubr.bf16.gmra.mrb[0].mxu0 %v899
      %v1341 = vpop.f32.mrb[0].mxu0
      %v1342 = vadd.f32 %v1133, %v1341
      %v1343 = vpop.f32.mrb[0].mxu0
      %v1344 = vpop.f32.mrb[0].mxu0
      %v1345 = vadd.f32 %v1136, %v1344
      %v1346 = vpop.f32.mrb[0].mxu0
      %1347 = vmatprep.mubr.bf16.mxu0 0
      %1348 = vmatmul.mubr.bf16.gmra.mrb[0].mxu0 %v900
      %v1349 = vpop.f32.mrb[0].mxu0
      %v1350 = vadd.f32 %v1141, %v1349
      %v1351 = vpop.f32.mrb[0].mxu0
      %v1352 = vpop.f32.mrb[0].mxu0
      %v1353 = vadd.f32 %v1144, %v1352
      %v1354 = vpop.f32.mrb[0].mxu0
      %1355 = vmatprep.mubr.bf16.mxu0 0
      %1356 = vmatmul.mubr.bf16.gmra.mrb[0].mxu0 %v901
      %v1357 = vpop.f32.mrb[0].mxu0
      %v1358 = vadd.f32 %v1149, %v1357
      %v1359 = vpop.f32.mrb[0].mxu0
      %v1360 = vpop.f32.mrb[0].mxu0
      %v1361 = vadd.f32 %v1152, %v1360
      %v1362 = vpop.f32.mrb[0].mxu0
      %1363 = vmatprep.mubr.bf16.mxu0 0
      %1364 = vmatmul.mubr.bf16.gmra.mrb[0].mxu0 %v902
      %v1365 = vpop.f32.mrb[0].mxu0
      %v1366 = vadd.f32 %v1157, %v1365
      %v1367 = vpop.f32.mrb[0].mxu0
      %v1368 = vpop.f32.mrb[0].mxu0
      %v1369 = vadd.f32 %v1160, %v1368
      %v1370 = vpop.f32.mrb[0].mxu0
      %1371 = vmatprep.mubr.bf16.mxu0 0
      %1372 = vmatmul.mubr.bf16.gmra.mrb[0].mxu0 %v903
      %v1373 = vpop.f32.mrb[0].mxu0
      %v1374 = vadd.f32 %v1165, %v1373
      %v1375 = vpop.f32.mrb[0].mxu0
      %v1376 = vpop.f32.mrb[0].mxu0
      %v1377 = vadd.f32 %v1168, %v1376
      %v1378 = vpop.f32.mrb[0].mxu0
      %1379 = vmatprep.mubr.bf16.mxu0 0
      %1380 = vmatmul.mubr.bf16.gmra.mrb[0].mxu0 %v904
      %v1381 = vpop.f32.mrb[0].mxu0
      %v1382 = vadd.f32 %v1173, %v1381
      %v1383 = vpop.f32.mrb[0].mxu0
      %v1384 = vpop.f32.mrb[0].mxu0
      %v1385 = vadd.f32 %v1176, %v1384
      %v1386 = vpop.f32.mrb[0].mxu0
      %1387 = vmatprep.mubr.bf16.mxu0 0
      %1388 = vmatmul.mubr.bf16.gmra.mrb[0].mxu0 %v905
      %v1389 = vpop.f32.mrb[0].mxu0
      %v1390 = vadd.f32 %v1181, %v1389
      %v1391 = vpop.f32.mrb[0].mxu0
      %v1392 = vpop.f32.mrb[0].mxu0
      %v1393 = vadd.f32 %v1184, %v1392
      %v1394 = vpop.f32.mrb[0].mxu0
      %1395 = vdwg.mxu0
      %v1396 = vld [vmem:[%s6 + $0x2] sm:$0x1]
      %v1398 = vlaneseq
      %v1399 = vshrl.u32 %v1398, 7
      %v1400 = vsub.s32 0, %v1399
      %v1401 = vrot.slane %v1396, %v1400
      %v1403 = vadd.f32 %v1270, %v1401
      %v1404 = vadd.f32 %v1273, %v1401
      %v1405 = vadd.f32 %v1278, %v1401
      %v1406 = vadd.f32 %v1281, %v1401
      %v1407 = vadd.f32 %v1286, %v1401
      %v1408 = vadd.f32 %v1289, %v1401
      %v1409 = vadd.f32 %v1294, %v1401
      %v1410 = vadd.f32 %v1297, %v1401
      %v1411 = vadd.f32 %v1302, %v1401
      %v1412 = vadd.f32 %v1305, %v1401
      %v1413 = vadd.f32 %v1310, %v1401
      %v1414 = vadd.f32 %v1313, %v1401
      %v1415 = vadd.f32 %v1318, %v1401
      %v1416 = vadd.f32 %v1321, %v1401
      %v1417 = vadd.f32 %v1326, %v1401
      %v1418 = vadd.f32 %v1329, %v1401
      %v1419 = vadd.f32 %v1334, %v1401
      %v1420 = vadd.f32 %v1337, %v1401
      %v1421 = vadd.f32 %v1342, %v1401
      %v1422 = vadd.f32 %v1345, %v1401
      %v1423 = vadd.f32 %v1350, %v1401
      %v1424 = vadd.f32 %v1353, %v1401
      %v1425 = vadd.f32 %v1358, %v1401
      %v1426 = vadd.f32 %v1361, %v1401
      %v1427 = vadd.f32 %v1366, %v1401
      %v1428 = vadd.f32 %v1369, %v1401
      %v1429 = vadd.f32 %v1374, %v1401
      %v1430 = vadd.f32 %v1377, %v1401
      %v1431 = vadd.f32 %v1382, %v1401
      %v1432 = vadd.f32 %v1385, %v1401
      %v1433 = vadd.f32 %v1390, %v1401
      %v1434 = vadd.f32 %v1393, %v1401
      %1435 = vst.msk [vmem:[%s302] sm:$0xff] %vm368, %v1403
      %1436 = vst.msk [vmem:[%s302 + $0x8] sm:$0xff] %vm368, %v1404
      %1437 = vst.msk [vmem:[%s302 + $0x10] sm:$0xff] %vm368, %v1405
      %1438 = vst.msk [vmem:[%s302 + $0x18] sm:$0xff] %vm368, %v1406
      %1439 = vst.msk [vmem:[%s302 + $0x20] sm:$0xff] %vm368, %v1407
      %1440 = vst.msk [vmem:[%s302 + $0x28] sm:$0xff] %vm368, %v1408
      %1441 = vst.msk [vmem:[%s302 + $0x30] sm:$0xff] %vm368, %v1409
      %1442 = vst.msk [vmem:[%s302 + $0x38] sm:$0xff] %vm368, %v1410
      %1443 = vst.msk [vmem:[%s302 + $0x40] sm:$0xff] %vm368, %v1411
      %1444 = vst.msk [vmem:[%s302 + $0x48] sm:$0xff] %vm368, %v1412
      %1445 = vst.msk [vmem:[%s302 + $0x50] sm:$0xff] %vm368, %v1413
      %1446 = vst.msk [vmem:[%s302 + $0x58] sm:$0xff] %vm368, %v1414
      %1447 = vst.msk [vmem:[%s302 + $0x60] sm:$0xff] %vm368, %v1415
      %1448 = vst.msk [vmem:[%s302 + $0x68] sm:$0xff] %vm368, %v1416
      %1449 = vst.msk [vmem:[%s302 + $0x70] sm:$0xff] %vm368, %v1417
      %1450 = vst.msk [vmem:[%s302 + $0x78] sm:$0xff] %vm368, %v1418
      %1451 = vst.msk [vmem:[%s302 + $0x80] sm:$0xff] %vm368, %v1419
      %1452 = vst.msk [vmem:[%s302 + $0x88] sm:$0xff] %vm368, %v1420
      %1453 = vst.msk [vmem:[%s302 + $0x90] sm:$0xff] %vm368, %v1421
      %1454 = vst.msk [vmem:[%s302 + $0x98] sm:$0xff] %vm368, %v1422
      %1455 = vst.msk [vmem:[%s302 + $0xa0] sm:$0xff] %vm368, %v1423
      %1456 = vst.msk [vmem:[%s302 + $0xa8] sm:$0xff] %vm368, %v1424
      %1457 = vst.msk [vmem:[%s302 + $0xb0] sm:$0xff] %vm368, %v1425
      %1458 = vst.msk [vmem:[%s302 + $0xb8] sm:$0xff] %vm368, %v1426
      %1459 = vst.msk [vmem:[%s302 + $0xc0] sm:$0xff] %vm368, %v1427
      %1460 = vst.msk [vmem:[%s302 + $0xc8] sm:$0xff] %vm368, %v1428
      %1461 = vst.msk [vmem:[%s302 + $0xd0] sm:$0xff] %vm368, %v1429
      %1462 = vst.msk [vmem:[%s302 + $0xd8] sm:$0xff] %vm368, %v1430
      %1463 = vst.msk [vmem:[%s302 + $0xe0] sm:$0xff] %vm368, %v1431
      %1464 = vst.msk [vmem:[%s302 + $0xe8] sm:$0xff] %vm368, %v1432
      %1465 = vst.msk [vmem:[%s302 + $0xf0] sm:$0xff] %vm368, %v1433
      %1466 = vst.msk [vmem:[%s302 + $0xf8] sm:$0xff] %vm368, %v1434
      %s1467 = smul.u32 32, %s18
      %p1468 = scmp.lt.s32.totalorder %s1467, 63
      %s1469 = scalar_select %p1468, %s1467, 63
      %s1470 = smul.addr %s1469, 8
      %s1471 = scalar_lea.vmem %s7, %s1470
      // Predicated region
      $region49: #{dlgm_forward.1} parent=47 // pred_check
        %p1472 = pneg %p193
      $region50: #{dlgm_forward.1} parent=47 // pred_check_branch
        %1474 = sbr.rel (%p1472) target = $region52
      $region51: #{dlgm_forward.1} parent=47 // pred_region
        %s1475 = smul.u32 32, %s18
      $region52: #{dlgm_forward.1} parent=47 // pred_fallthru
        _
    $region48: #{dlgm_forward.1} parent=5 // pred_fallthru
      _
    %p1476 = scmp.le.s32.totalorder 2, %s13
    // Predicated region
    $region53: #{dlgm_forward.1} parent=5 // pred_check
      %p1477 = pneg %p1476
    $region54: #{dlgm_forward.1} parent=5 // pred_check_branch
      %1479 = sbr.rel (%p1477) target = $region56
    $region55: #{dlgm_forward.1} parent=5 // pred_region
      %s1480 = ssub.s32 %s13, 2
      // Predicated region
      $region57: #{dlgm_forward.1} parent=55 // pred_check
        %p1481 = pneg %p199
      $region58: #{dlgm_forward.1} parent=55 // pred_check_branch
        %1483 = sbr.rel (%p1481) target = $region60
      $region59: #{dlgm_forward.1} parent=55 // pred_region
        %s1484 = smul.u32 32, %s19
        %p1485 = scmp.lt.s32.totalorder %s1484, 63
        %s1486 = scalar_select %p1485, %s1484, 63
        %s1487 = smul.addr %s1486, 8
        %s1488 = scalar_lea.vmem %s7, %s1487
      $region60: #{dlgm_forward.1} parent=55 // pred_fallthru
        _
    $region56: #{dlgm_forward.1} parent=5 // pred_fallthru
      _
  $region6: #{dlgm_forward.1} parent=0 // loop_footer
    %s17 = sadd.s32 1, %s13
  $region7: #{dlgm_forward.1} parent=0 // loop_footer_branch
    %12 = sbr.rel target = $region3
  $region8: #{dlgm_forward.1} parent=0 // loop_exit
    _

</llo_original>
